<compile_context>
chip_gen: v7x
topology: tpu7x:2x2x1
jax: 0.10.0
libtpu: 0.0.40
codegen_flags: <defaults>
</compile_context>

<pallas_src>
import jax
import jax.numpy as jnp
from jax import lax
from jax.experimental import pallas as pl
from jax.experimental.pallas import tpu as pltpu


def _conv_stats_kernel(p_ref, w_ref, y_ref, stats_ref):
    """Phase 1: y = W @ patches (per tile) + per-batch BN partial statistics.

    p_ref:     (1, KKCp, TM)      bf16 im2col patches (zero-padded depth/columns)
    w_ref:     (Cout, KKCp)       bf16 reshaped, zero-padded conv weight
    y_ref:     (1, Cout, TM)      bf16 pre-BN activations (lane-dense store)
    stats_ref: (1, 2, Cout, 128)  f32, [0]=sum(y), [1]=sum(y*y); same block index
                                  for every spatial tile -> stays resident in
                                  VMEM and is accumulated across the m axis.
    """
    m = pl.program_id(1)

    @pl.when(m == 0)
    def _init():
        stats_ref[...] = jnp.zeros_like(stats_ref)

    # One MXU matmul per tile: 128-deep contraction, lane-dense (Cout, TM) result.
    y = jnp.dot(w_ref[...], p_ref[0], preferred_element_type=jnp.float32)
    y_ref[...] = y.astype(y_ref.dtype)[None]

    # Fused BN partial statistics, accumulated into the resident output block.
    lanes = stats_ref.shape[-1]
    s = jnp.sum(y, axis=1, keepdims=True)           # (Cout, 1)
    ss = jnp.sum(y * y, axis=1, keepdims=True)      # (Cout, 1)
    stats_ref[0, 0] = stats_ref[0, 0] + jnp.broadcast_to(s, (s.shape[0], lanes))
    stats_ref[0, 1] = stats_ref[0, 1] + jnp.broadcast_to(ss, (ss.shape[0], lanes))


def _bn_relu_kernel(y_ref, sc_ref, sh_ref, o_ref):
    """Phase 2: out = relu(y * scale + shift), lane-dense elementwise pass.

    y_ref: (1, Cout, TM) bf16; sc_ref/sh_ref: (Cout, 1) f32; o_ref: (1, Cout, TM) f32
    """
    y = y_ref[0].astype(jnp.float32)
    o_ref[...] = jnp.maximum(y * sc_ref[...] + sh_ref[...], 0.0)[None]


def _pick_tile(m_pad):
    """Largest lane-dense spatial tile dividing the (128-aligned) spatial extent."""
    for t in (8192, 4096, 2048, 1024, 512, 256, 128):
        if m_pad % t == 0:
            return t
    return 128


def conv_block_forward(x_ncdhw, weight_oidhw, bias, gamma, beta, *,
                       padding=1, eps=1e-5):
    """PyTorch-style NCDHW in -> NCDHW out (stride fixed at the module default of 1).

    The Conv3d bias is accepted for interface parity but not applied: with
    training-mode BatchNorm the bias cancels exactly through the batch mean,
    so the module output is identical with or without it.
    """
    del bias  # cancels exactly under training-mode BatchNorm

    n, cin, d, h, w = x_ncdhw.shape
    cout, cin_w, kd, kh, kw = weight_oidhw.shape
    assert cin == cin_w
    od = d + 2 * padding - kd + 1
    oh = h + 2 * padding - kh + 1
    ow = w + 2 * padding - kw + 1
    m_sp = od * oh * ow                       # spatial rows per batch
    kkc = kd * kh * kw * cin                  # contraction depth (108 here)
    kkc_pad = -(-kkc // 128) * 128            # pad contraction depth to 128
    m_pad = -(-m_sp // 128) * 128             # lane-align the spatial extent

    tm = _pick_tile(m_pad)
    gm = m_pad // tm

    # ---- glue: channels-minor im2col, built directly in bf16 ----
    xp = jnp.pad(x_ncdhw.astype(jnp.bfloat16),
                 ((0, 0), (0, 0),
                  (padding, padding), (padding, padding), (padding, padding)))
    taps = []
    for i in range(kd):
        for j in range(kh):
            for k in range(kw):
                taps.append(xp[:, :, i:i + od, j:j + oh, k:k + ow]
                            .reshape(n, cin, m_sp))
    patches = jnp.stack(taps, axis=1).reshape(n, kkc, m_sp)
    patches = jnp.pad(patches, ((0, 0), (0, kkc_pad - kkc), (0, m_pad - m_sp)))

    # weight (Cout, Cin, KD, KH, KW) -> (Cout, KD, KH, KW, Cin) -> (Cout, KKCp)
    w2 = jnp.transpose(weight_oidhw, (0, 2, 3, 4, 1)).reshape(cout, kkc)
    w2 = jnp.pad(w2, ((0, 0), (0, kkc_pad - kkc))).astype(jnp.bfloat16)

    # ---- phase 1: conv matmul + fused, VMEM-accumulated BN partial statistics ----
    y, stats = pl.pallas_call(
        _conv_stats_kernel,
        grid=(n, gm),
        in_specs=[
            pl.BlockSpec((1, kkc_pad, tm), lambda b, m: (b, 0, m)),
            pl.BlockSpec((cout, kkc_pad), lambda b, m: (0, 0)),
        ],
        out_specs=[
            pl.BlockSpec((1, cout, tm), lambda b, m: (b, 0, m)),
            pl.BlockSpec((1, 2, cout, 128), lambda b, m: (b, 0, 0, 0)),
        ],
        out_shape=[
            jax.ShapeDtypeStruct((n, cout, m_pad), jnp.bfloat16),
            jax.ShapeDtypeStruct((n, 2, cout, 128), jnp.float32),
        ],
        compiler_params=pltpu.CompilerParams(
            # m axis must be sequential ('arbitrary') for the stats accumulator;
            # batch axis stays 'parallel' so v7x megacore still shards on n.
            dimension_semantics=("parallel", "arbitrary"),
            vmem_limit_bytes=32 * 1024 * 1024),
    )(patches, w2)

    # ---- tiny glue: global (batch+spatial) stats -> per-channel scale/shift ----
    count = jnp.float32(n * m_sp)             # true count (padded columns are zero)
    sum_c = stats[:, 0, :, 0].sum(axis=0)     # (Cout,)
    sumsq_c = stats[:, 1, :, 0].sum(axis=0)   # (Cout,)
    mean = sum_c / count
    var = jnp.maximum(sumsq_c / count - mean * mean, 0.0)   # clamp E[y^2]-E[y]^2
    inv_std = lax.rsqrt(var + eps)
    g = gamma.astype(jnp.float32)
    scale = (g * inv_std).reshape(cout, 1)
    shift = (beta.astype(jnp.float32) - mean * g * inv_std).reshape(cout, 1)

    # ---- phase 2: normalize + ReLU (lane-dense elementwise pass over bf16 y) ----
    out = pl.pallas_call(
        _bn_relu_kernel,
        grid=(n, gm),
        in_specs=[
            pl.BlockSpec((1, cout, tm), lambda b, m: (b, 0, m)),
            pl.BlockSpec((cout, 1), lambda b, m: (0, 0)),
            pl.BlockSpec((cout, 1), lambda b, m: (0, 0)),
        ],
        out_specs=pl.BlockSpec((1, cout, tm), lambda b, m: (b, 0, m)),
        out_shape=jax.ShapeDtypeStruct((n, cout, m_pad), jnp.float32),
        compiler_params=pltpu.CompilerParams(
            dimension_semantics=("parallel", "parallel"),
            vmem_limit_bytes=32 * 1024 * 1024),
    )(y, scale, shift)

    # (N, Cout, M_pad) -> drop lane padding -> NCDHW is a pure reshape.
    return out[:, :, :m_sp].reshape(n, cout, od, oh, ow)


def reference_forward(x, weight, bias, gamma, beta, padding, eps):
    """Plain-JAX reference with identical semantics (for self-check)."""
    conv = lax.conv_general_dilated(
        x, weight, window_strides=(1, 1, 1),
        padding=[(padding, padding)] * 3,
        dimension_numbers=("NCDHW", "OIDHW", "NCDHW"),
        precision=lax.Precision.HIGHEST)
    conv = conv + bias.reshape(1, -1, 1, 1, 1)
    mean = jnp.mean(conv, axis=(0, 2, 3, 4), keepdims=True)
    var = jnp.mean((conv - mean) ** 2, axis=(0, 2, 3, 4), keepdims=True)
    y_hat = (conv - mean) / jnp.sqrt(var + eps)
    out = y_hat * gamma.reshape(1, -1, 1, 1, 1) + beta.reshape(1, -1, 1, 1, 1)
    return jnp.maximum(out, 0.0)


if __name__ == "__main__":
    # conv_block(ch_in=4, ch_out=8, k_size=3, stride=1, p=1)
    N, CIN, COUT, D, H, W, K, P = 2, 4, 8, 16, 16, 16, 3, 1

    key = jax.random.PRNGKey(0)
    kx, kw_, kb = jax.random.split(key, 3)
    x = jax.random.normal(kx, (N, CIN, D, H, W), jnp.float32)
    conv_weight = jax.random.normal(kw_, (COUT, CIN, K, K, K), jnp.float32) * 0.1
    conv_bias = jax.random.normal(kb, (COUT,), jnp.float32) * 0.1
    bn_gamma = jnp.ones((COUT,), jnp.float32)    # nn.BatchNorm3d default init
    bn_beta = jnp.zeros((COUT,), jnp.float32)

    out = conv_block_forward(x, conv_weight, conv_bias, bn_gamma, bn_beta,
                             padding=P, eps=1e-5)
    out = jax.block_until_ready(out)

    ref = reference_forward(x, conv_weight, conv_bias, bn_gamma, bn_beta, P, 1e-5)
    assert out.shape == (N, COUT, D, H, W), out.shape
    max_err = float(jnp.max(jnp.abs(out - ref)))
    # bf16 patches/weights + bf16 intermediate -> allow ~2e-2 vs the f32 reference
    assert bool(jnp.allclose(out, ref, atol=2e-2, rtol=2e-2)), max_err

    print("KERNEL_OK")
</pallas_src>

<mosaic_0001>
module attributes {stable_mosaic.version = 11 : i64} {
  func.func @_conv_stats_kernel(%arg0: i32, %arg1: i32, %arg2: memref<1x128x4096xbf16, #tpu.memory_space<vmem>>, %arg3: memref<8x128xbf16, #tpu.memory_space<vmem>>, %arg4: memref<1x8x4096xbf16, #tpu.memory_space<vmem>>, %arg5: memref<1x2x8x128xf32, #tpu.memory_space<vmem>>) attributes {dimension_semantics = [#tpu.dimension_semantics<parallel>, #tpu.dimension_semantics<arbitrary>], iteration_bounds = array<i64: 2, 1>, scalar_prefetch = 0 : i64, scratch_operands = 0 : i64, tpu.core_type = #tpu.core_type<tc>, window_params = [{transform_indices = @transform_0, window_bounds = array<i64: 1, 128, 4096>}, {pipeline_mode = #tpu.pipeline_mode<synchronous>, transform_indices = @transform_1, window_bounds = array<i64: 8, 128>}, {transform_indices = @transform_2, window_bounds = array<i64: 1, 8, 4096>}, {transform_indices = @transform_3, window_bounds = array<i64: 1, 2, 8, 128>}]} {
    %c0_i32 = arith.constant 0 : i32
    %0 = arith.cmpi eq, %arg1, %c0_i32 : i32
    %1 = arith.extui %0 : i1 to i32
    %c0_i32_0 = arith.constant 0 : i32
    %2 = arith.cmpi ne, %1, %c0_i32_0 : i32
    scf.if %2 {
      %cst_25 = arith.constant 0.000000e+00 : f32
      %31 = vector.broadcast %cst_25 : f32 to vector<1x2x8x128xf32>
      %c0_26 = arith.constant 0 : index
      %c0_27 = arith.constant 0 : index
      %c0_28 = arith.constant 0 : index
      %c0_29 = arith.constant 0 : index
      %32 = vector.load %arg5[%c0_26, %c0_27, %c0_28, %c0_29] : memref<1x2x8x128xf32, #tpu.memory_space<vmem>>, vector<1x2x8x128xf32>
      tpu.vector_store %arg5[%c0_26, %c0_27, %c0_28, %c0_29], %31 {strides = array<i32>} : memref<1x2x8x128xf32, #tpu.memory_space<vmem>>, vector<1x2x8x128xf32>,
    } else {
    }
    %c0 = arith.constant 0 : index
    %c0_1 = arith.constant 0 : index
    %3 = vector.load %arg3[%c0, %c0_1] : memref<8x128xbf16, #tpu.memory_space<vmem>>, vector<8x128xbf16>
    %c0_2 = arith.constant 0 : index
    %c0_3 = arith.constant 0 : index
    %c0_4 = arith.constant 0 : index
    %4 = vector.load %arg2[%c0_2, %c0_3, %c0_4] : memref<1x128x4096xbf16, #tpu.memory_space<vmem>>, vector<1x128x4096xbf16>
    %5 = vector.shape_cast %4 : vector<1x128x4096xbf16> to vector<128x4096xbf16>
    %cst = arith.constant dense<0.000000e+00> : vector<8x4096xf32>
    %6 = tpu.matmul %3, %5, %cst {dimension_numbers = #tpu.dot_dimension_numbers<[1], [0], [0], [1], [0, 0, 1, 1], [], []>} : vector<8x128xbf16>, vector<128x4096xbf16>, vector<8x4096xf32> -> vector<8x4096xf32>
    %7 = arith.truncf %6 : vector<8x4096xf32> to vector<8x4096xbf16>
    %8 = vector.shape_cast %7 : vector<8x4096xbf16> to vector<1x8x4096xbf16>
    %c0_5 = arith.constant 0 : index
    %c0_6 = arith.constant 0 : index
    %c0_7 = arith.constant 0 : index
    %9 = vector.load %arg4[%c0_5, %c0_6, %c0_7] : memref<1x8x4096xbf16, #tpu.memory_space<vmem>>, vector<1x8x4096xbf16>
    tpu.vector_store %arg4[%c0_5, %c0_6, %c0_7], %8 {strides = array<i32>} : memref<1x8x4096xbf16, #tpu.memory_space<vmem>>, vector<1x8x4096xbf16>,
    %cst_8 = arith.constant dense<0.000000e+00> : vector<8xf32>
    %10 = vector.multi_reduction <add>, %6, %cst_8 [1] : vector<8x4096xf32> to vector<8xf32>
    %11 = vector.shape_cast %10 : vector<8xf32> to vector<8x1xf32>
    %12 = arith.mulf %6, %6 : vector<8x4096xf32>
    %cst_9 = arith.constant dense<0.000000e+00> : vector<8xf32>
    %13 = vector.multi_reduction <add>, %12, %cst_9 [1] : vector<8x4096xf32> to vector<8xf32>
    %14 = vector.shape_cast %13 : vector<8xf32> to vector<8x1xf32>
    %c0_10 = arith.constant 0 : index
    %c0_11 = arith.constant 0 : index
    %c0_12 = arith.constant 0 : index
    %c0_13 = arith.constant 0 : index
    %15 = vector.load %arg5[%c0_10, %c0_11, %c0_12, %c0_13] : memref<1x2x8x128xf32, #tpu.memory_space<vmem>>, vector<1x1x8x128xf32>
    %16 = vector.shape_cast %15 : vector<1x1x8x128xf32> to vector<8x128xf32>
    %17 = vector.shape_cast %11 : vector<8x1xf32> to vector<8x1xf32>
    %18 = vector.broadcast %17 : vector<8x1xf32> to vector<8x128xf32>
    %19 = arith.addf %16, %18 : vector<8x128xf32>
    %c0_14 = arith.constant 0 : index
    %c0_15 = arith.constant 0 : index
    %c0_16 = arith.constant 0 : index
    %c0_17 = arith.constant 0 : index
    %20 = vector.load %arg5[%c0_14, %c0_15, %c0_16, %c0_17] : memref<1x2x8x128xf32, #tpu.memory_space<vmem>>, vector<1x1x8x128xf32>
    %21 = vector.shape_cast %20 : vector<1x1x8x128xf32> to vector<8x128xf32>
    %22 = vector.shape_cast %19 : vector<8x128xf32> to vector<1x1x8x128xf32>
    tpu.vector_store %arg5[%c0_14, %c0_15, %c0_16, %c0_17], %22 {strides = array<i32>} : memref<1x2x8x128xf32, #tpu.memory_space<vmem>>, vector<1x1x8x128xf32>,
    %c0_18 = arith.constant 0 : index
    %c1 = arith.constant 1 : index
    %c0_19 = arith.constant 0 : index
    %c0_20 = arith.constant 0 : index
    %23 = vector.load %arg5[%c0_18, %c1, %c0_19, %c0_20] : memref<1x2x8x128xf32, #tpu.memory_space<vmem>>, vector<1x1x8x128xf32>
    %24 = vector.shape_cast %23 : vector<1x1x8x128xf32> to vector<8x128xf32>
    %25 = vector.shape_cast %14 : vector<8x1xf32> to vector<8x1xf32>
    %26 = vector.broadcast %25 : vector<8x1xf32> to vector<8x128xf32>
    %27 = arith.addf %24, %26 : vector<8x128xf32>
    %c0_21 = arith.constant 0 : index
    %c1_22 = arith.constant 1 : index
    %c0_23 = arith.constant 0 : index
    %c0_24 = arith.constant 0 : index
    %28 = vector.load %arg5[%c0_21, %c1_22, %c0_23, %c0_24] : memref<1x2x8x128xf32, #tpu.memory_space<vmem>>, vector<1x1x8x128xf32>
    %29 = vector.shape_cast %28 : vector<1x1x8x128xf32> to vector<8x128xf32>
    %30 = vector.shape_cast %27 : vector<8x128xf32> to vector<1x1x8x128xf32>
    tpu.vector_store %arg5[%c0_21, %c1_22, %c0_23, %c0_24], %30 {strides = array<i32>} : memref<1x2x8x128xf32, #tpu.memory_space<vmem>>, vector<1x1x8x128xf32>,
    return
  }
  func.func @transform_0(%arg0: i32, %arg1: i32) -> (i32, i32, i32) {
    %c0_i32 = arith.constant 0 : i32
    %c0_i32_0 = arith.constant 0 : i32
    return %arg0, %c0_i32, %arg1 : i32, i32, i32
  }
  func.func @transform_1(%arg0: i32, %arg1: i32) -> (i32, i32) {
    %c0_i32 = arith.constant 0 : i32
    %c0_i32_0 = arith.constant 0 : i32
    %c0_i32_1 = arith.constant 0 : i32
    return %c0_i32, %c0_i32_0 : i32, i32
  }
  func.func @transform_2(%arg0: i32, %arg1: i32) -> (i32, i32, i32) {
    %c0_i32 = arith.constant 0 : i32
    %c0_i32_0 = arith.constant 0 : i32
    return %arg0, %c0_i32, %arg1 : i32, i32, i32
  }
  func.func @transform_3(%arg0: i32, %arg1: i32) -> (i32, i32, i32, i32) {
    %c0_i32 = arith.constant 0 : i32
    %c0_i32_0 = arith.constant 0 : i32
    %c0_i32_1 = arith.constant 0 : i32
    %c0_i32_2 = arith.constant 0 : i32
    return %arg0, %c0_i32, %c0_i32_0, %c0_i32_1 : i32, i32, i32, i32
  }
}

</mosaic_0001>

<llo_original>
// kernel: tpu_custom_call.1
$region0: #{tpu_custom_call.1}
  #allocation0 [shape = 'u32[]', space=smem, size = 0x4, offset = 0x4, fixed_abs, tag = 'smem constant byte address 0x4 - core index']
  #allocation1 [shape = 'u32[144,128]{1,0:T(1,128)}', space=vmem, size = 0x12000, scoped, tag = 'internal scratch']
  %s0 = inlined_call_operand.hbm [shape: bf16[2,128,4096], index: 0, kind: input, shape index: {}]
  %s1 = inlined_call_operand.hbm [shape: bf16[8,128], index: 1, kind: input, shape index: {}]
  %s2 = inlined_call_operand.hbm [shape: bf16[2,8,4096], index: 2, kind: output, shape index: {0}]
  %s3 = inlined_call_operand.hbm [shape: f32[2,2,8,128], index: 3, kind: output, shape index: {1}]
  %4 = xla_tuple %s2, %s3
  %s5 = sld [smem:[#allocation0]]
  $region61: #{tpu_custom_call.1} parent=0
    _
  %s7 = ssub.s32 1, %s5
  %s8 = scalar_select 0, %s7, %s5
  $region1: #{tpu_custom_call.1} parent=0
    #allocation2 [shape = 'u8[2097152]{0}', space=vmem, size = 0x200000, scoped, tag = 'input window, operand 0']
    #allocation3 [shape = 's32[2]{0}', space=sflag, size = 0x8, scoped, tag = 'scoped memory for tpu_custom_call.1']
    #allocation4 [shape = 's32[2]{0}', space=sflag, size = 0x8, scoped, tag = 'scoped memory for tpu_custom_call.1']
    #allocation5 [shape = 'u8[2048]{0}', space=vmem, size = 0x800, scoped, tag = 'input window, operand 1, single buffered']
    #allocation6 [shape = 's32[1]{0}', space=sflag, size = 0x4, scoped, tag = 'scoped memory for tpu_custom_call.1']
    #allocation7 [shape = 'u8[131072]{0}', space=vmem, size = 0x20000, scoped, tag = 'output window, operand 0']
    #allocation8 [shape = 'u8[16384]{0}', space=vmem, size = 0x4000, scoped, tag = 'output window, operand 1']
    #allocation9 [shape = 's32[2]{0}', space=sflag, size = 0x8, scoped, tag = 'scoped memory for tpu_custom_call.1']
    %9 = vsyncpa [#allocation3], 0
    %s10 = scalar_lea.sflag [#allocation3], 1
    %11 = vsyncpa %s10, 0
    %12 = vsyncpa [#allocation6], 0
    %13 = vsyncpa [#allocation4], 0
    %s14 = scalar_lea.sflag [#allocation4], 1
    %15 = vsyncpa %s14, 0
    %16 = vsyncpa [#allocation9], 0
    %s17 = scalar_lea.sflag [#allocation9], 1
    %18 = vsyncpa %s17, 0
    loop: start=0, step=1, limit=4
    $region2: #{tpu_custom_call.1} parent=1 // loop_pre_header
      _
    $region3: #{tpu_custom_call.1} parent=1 // loop_header
      %s20 = sphi 0, %s24
      %p21 = scmp.ge.s32.totalorder %s20, 4
      %s27 = sphi 0, %s39
      %s28 = sphi 0, %s35
      %s29 = sphi 0, %s27
      %s30 = sphi 0, %s28
      %s31 = sphi 0, %s29
      %s32 = sphi 0, %s30
      %s44 = sphi 0, %s46
      %s47 = sphi 0, %s44
      %s48 = sphi 0, %s47
      %s64 = sphi 0, %s48
      %s68 = sphi 0, %s68
      %s70 = sphi 0, %s68
      %s71 = sphi 0, %s70
      %s85 = sphi 0, %s71
      %s93 = sphi 0, %s95
      %s96 = sphi 0, %s93
      %s97 = sphi 0, %s96
      %s113 = sphi 0, %s97
      %s119 = sphi 0, %s121
      %s122 = sphi 0, %s119
      %s123 = sphi 0, %s122
      %s139 = sphi 0, %s123
    $region4: #{tpu_custom_call.1} parent=1 // loop_header_branch
      %23 = sbr.rel (%p21) target = $region8
    $region5: #{tpu_custom_call.1} parent=1 // loop_body
      %s25 = ssub.s32 %s20, 1
      %s26 = ssub.s32 %s20, 2
      %s33 = sadd.s32 1, %s28
      %p34 = scmp.ge.s32.totalorder %s33, 1
      %s35 = scalar_select %p34, 0, %s33
      %s36 = sadd.s32 1, %s27
      %s37 = scalar_select %p34, %s36, %s27
      %p38 = scmp.ge.s32.totalorder %s37, 2
      %s39 = scalar_select %p38, 0, %s37
      %s40 = ssub.s32 %s27, %s39
      %s41 = ssub.s32 %s28, %s35
      %s42 = sor.u32 %s40, %s41
      %p43 = scmp.eq.s32.totalorder %s42, 0
      %s45 = sadd.s32 %s44, 1
      %s46 = scalar_select %p43, %s44, %s45
      %p49 = pneg %p43
      %p50 = scmp.eq.s32.totalorder %s20, 1
      %p51 = por %p49, %p50
      %p52 = scmp.ne.s32.totalorder %s44, %s47
      %p53 = scmp.eq.s32.totalorder %s20, 0
      %p54 = por %p52, %p53
      %p55 = scmp.ne.s32.totalorder %s44, %s47
      %p56 = scmp.eq.s32.totalorder %s25, 1
      %p57 = por %p55, %p56
      %p58 = scmp.ne.s32.totalorder %s47, %s48
      %p59 = scmp.eq.s32.totalorder %s25, 0
      %p60 = por %p58, %p59
      %p61 = scmp.ne.s32.totalorder %s47, %s48
      %p62 = scmp.eq.s32.totalorder %s26, 1
      %p63 = por %p61, %p62
      %p65 = scmp.ne.s32.totalorder %s48, %s64
      %p66 = scmp.eq.s32.totalorder %s26, 0
      %p67 = por %p65, %p66
      %s69 = sadd.s32 %s68, 1
      %p72 = scmp.eq.s32.totalorder %s20, 1
      %p73 = scmp.ne.s32.totalorder %s68, %s70
      %p74 = scmp.eq.s32.totalorder %s20, 0
      %p75 = por %p73, %p74
      %p76 = scmp.ne.s32.totalorder %s68, %s70
      %p77 = scmp.eq.s32.totalorder %s25, 1
      %p78 = por %p76, %p77
      %p79 = scmp.ne.s32.totalorder %s70, %s71
      %p80 = scmp.eq.s32.totalorder %s25, 0
      %p81 = por %p79, %p80
      %p82 = scmp.ne.s32.totalorder %s70, %s71
      %p83 = scmp.eq.s32.totalorder %s26, 1
      %p84 = por %p82, %p83
      %p86 = scmp.ne.s32.totalorder %s71, %s85
      %p87 = scmp.eq.s32.totalorder %s26, 0
      %p88 = por %p86, %p87
      %s89 = ssub.s32 %s27, %s39
      %s90 = ssub.s32 %s28, %s35
      %s91 = sor.u32 %s89, %s90
      %p92 = scmp.eq.s32.totalorder %s91, 0
      %s94 = sadd.s32 %s93, 1
      %s95 = scalar_select %p92, %s93, %s94
      %p98 = pneg %p92
      %p99 = scmp.eq.s32.totalorder %s20, 1
      %p100 = por %p98, %p99
      %p101 = scmp.ne.s32.totalorder %s93, %s96
      %p102 = scmp.eq.s32.totalorder %s20, 0
      %p103 = por %p101, %p102
      %p104 = scmp.ne.s32.totalorder %s93, %s96
      %p105 = scmp.eq.s32.totalorder %s25, 1
      %p106 = por %p104, %p105
      %p107 = scmp.ne.s32.totalorder %s96, %s97
      %p108 = scmp.eq.s32.totalorder %s25, 0
      %p109 = por %p107, %p108
      %p110 = scmp.ne.s32.totalorder %s96, %s97
      %p111 = scmp.eq.s32.totalorder %s26, 1
      %p112 = por %p110, %p111
      %p114 = scmp.ne.s32.totalorder %s97, %s113
      %p115 = scmp.eq.s32.totalorder %s26, 0
      %p116 = por %p114, %p115
      %s117 = ssub.s32 %s27, %s39
      %p118 = scmp.eq.s32.totalorder %s117, 0
      %s120 = sadd.s32 %s119, 1
      %s121 = scalar_select %p118, %s119, %s120
      %p124 = pneg %p118
      %p125 = scmp.eq.s32.totalorder %s20, 1
      %p126 = por %p124, %p125
      %p127 = scmp.ne.s32.totalorder %s119, %s122
      %p128 = scmp.eq.s32.totalorder %s20, 0
      %p129 = por %p127, %p128
      %p130 = scmp.ne.s32.totalorder %s119, %s122
      %p131 = scmp.eq.s32.totalorder %s25, 1
      %p132 = por %p130, %p131
      %p133 = scmp.ne.s32.totalorder %s122, %s123
      %p134 = scmp.eq.s32.totalorder %s25, 0
      %p135 = por %p133, %p134
      %p136 = scmp.ne.s32.totalorder %s122, %s123
      %p137 = scmp.eq.s32.totalorder %s26, 1
      %p138 = por %p136, %p137
      %p140 = scmp.ne.s32.totalorder %s123, %s139
      %p141 = scmp.eq.s32.totalorder %s26, 0
      %p142 = por %p140, %p141
      %p143 = scmp.le.s32.totalorder 1, %s20
      %p144 = scmp.lt.s32.totalorder %s20, 3
      %p145 = pnand %p143, %p144
      %p146 = pneg %p145
      // Predicated region
      $region9: #{tpu_custom_call.1} parent=5 // pred_check
        _
      $region10: #{tpu_custom_call.1} parent=5 // pred_check_branch
        %148 = sbr.rel (%p145) target = $region12
      $region11: #{tpu_custom_call.1} parent=5 // pred_region
        %s149 = ssub.s32 %s20, 1
        // Predicated region
        $region13: #{tpu_custom_call.1} parent=11 // pred_check
          %p150 = pneg %p81
        $region14: #{tpu_custom_call.1} parent=11 // pred_check_branch
          %152 = sbr.rel (%p150) target = $region16
        $region15: #{tpu_custom_call.1} parent=11 // pred_region
          %s154 = ssub.s32 64, 64
          %155 = vsyncadd [#allocation6], %s154
          %s157 = sshll.u32 [#allocation5], 4
          %s158 = int_to_ptr.vmem [resolvable:$true] %s157
          %160 = dma.hbm_to_vmem [thread:$0]  %s1, 64, %s158, [#allocation6]
        $region16: #{tpu_custom_call.1} parent=11 // pred_fallthru
          _
      $region12: #{tpu_custom_call.1} parent=5 // pred_fallthru
        _
      %p161 = scmp.lt.s32.totalorder %s20, 2
      // Predicated region
      $region17: #{tpu_custom_call.1} parent=5 // pred_check
        %p162 = pneg %p161
      $region18: #{tpu_custom_call.1} parent=5 // pred_check_branch
        %164 = sbr.rel (%p162) target = $region20
      $region19: #{tpu_custom_call.1} parent=5 // pred_region
        // Predicated region
        $region21: #{tpu_custom_call.1} parent=19 // pred_check
          %p165 = pneg %p54
        $region22: #{tpu_custom_call.1} parent=19 // pred_check_branch
          %167 = sbr.rel (%p165) target = $region24
        $region23: #{tpu_custom_call.1} parent=19 // pred_region
          %s168 = sand.u32 %s44, 1
          %s169 = scalar_lea.sflag [#allocation3], %s168
          %s170 = sand.u32 %s44, 1
          %s171 = smul.addr %s170, 2048
          %s172 = scalar_lea.vmem [#allocation2], %s171
          %s173 = smul.u32 32, %s28
          %s175 = ssub.s32 32768, 32768
          %176 = vsyncadd %s169, %s175
          %s177 = smul.addr %s27, 512
          %s178 = sadd.s32 %s173, %s177
          %s179 = smul.addr %s178, 64
          %s180 = scalar_lea.hbm %s0, %s179
          %s181 = sshll.u32 %s172, 4
          %s182 = int_to_ptr.vmem [resolvable:$true] %s181
          %187 = dma.hbm_to_vmem [thread:$0]  %s180, 32768, %s182, %s169, 2048, 2048, 128
        $region24: #{tpu_custom_call.1} parent=19 // pred_fallthru
          _
      $region20: #{tpu_custom_call.1} parent=5 // pred_fallthru
        _
      %p188 = scmp.le.s32.totalorder 1, %s20
      %p189 = scmp.lt.s32.totalorder %s20, 3
      %p190 = pnand %p188, %p189
      %p191 = pneg %p190
      // Predicated region
      $region25: #{tpu_custom_call.1} parent=5 // pred_check
        _
      $region26: #{tpu_custom_call.1} parent=5 // pred_check_branch
        %193 = sbr.rel (%p190) target = $region28
      $region27: #{tpu_custom_call.1} parent=5 // pred_region
        %s194 = ssub.s32 %s20, 1
        %s195 = sand.u32 %s47, 1
        %s196 = scalar_lea.sflag [#allocation3], %s195
        %s197 = sand.u32 %s47, 1
        %s198 = smul.addr %s197, 2048
        %s199 = scalar_lea.vmem [#allocation2], %s198
        // Predicated region
        $region29: #{tpu_custom_call.1} parent=27 // pred_check
          %p200 = pneg %p60
        $region30: #{tpu_custom_call.1} parent=27 // pred_check_branch
          %202 = sbr.rel (%p200) target = $region32
        $region31: #{tpu_custom_call.1} parent=27 // pred_region
          %203 = dma.done %s196, 32768
        $region32: #{tpu_custom_call.1} parent=27 // pred_fallthru
          _
        // Predicated region
        $region33: #{tpu_custom_call.1} parent=27 // pred_check
          %p204 = pneg %p81
        $region34: #{tpu_custom_call.1} parent=27 // pred_check_branch
          %206 = sbr.rel (%p204) target = $region36
        $region35: #{tpu_custom_call.1} parent=27 // pred_region
          %207 = dma.done [#allocation6], 64
        $region36: #{tpu_custom_call.1} parent=27 // pred_fallthru
          _
        %s208 = sand.u32 %s47, 1
        %s209 = scalar_lea.sflag [#allocation3], %s208
        %s210 = sand.u32 %s47, 1
        %s211 = smul.addr %s210, 2048
        %s212 = scalar_lea.vmem [#allocation2], %s211
        %p213 = pneg %p60
        %p214 = pneg %p57
        %p215 = pneg %p81
        %p216 = pneg %p78
        %p217 = pneg %p109
        %p218 = pneg %p106
        %s219 = sand.u32 %s96, 1
        %s220 = scalar_lea.sflag [#allocation4], %s219
        %s221 = sand.u32 %s96, 1
        %s222 = smul.addr %s221, 128
        %s223 = scalar_lea.vmem [#allocation7], %s222
        %p224 = pneg %p135
        %p225 = pneg %p132
        %s226 = sand.u32 %s122, 1
        %s227 = scalar_lea.sflag [#allocation9], %s226
        %s228 = sand.u32 %s122, 1
        %s229 = smul.addr %s228, 16
        %s230 = scalar_lea.vmem [#allocation8], %s229
        %s231 = smul.u32 32, %s30
        %s232 = smul.u32 32, %s30
        %p234 = scmp.eq.s32.totalorder %s30, 0
        // Predicated region
        $region37: #{tpu_custom_call.1} parent=27 // pred_check
          %p235 = pneg %p234
        $region38: #{tpu_custom_call.1} parent=27 // pred_check_branch
          %237 = sbr.rel (%p235) target = $region40
        $region39: #{tpu_custom_call.1} parent=27 // pred_region
          %238 = vst [vmem:[%s230] sm:$0xff] 0.0
          %239 = vst [vmem:[%s230 + $0x8] sm:$0xff] 0.0
        $region40: #{tpu_custom_call.1} parent=27 // pred_fallthru
          _
        %v240 = vld [vmem:[#allocation5] sm:$0xf]
        %v241 = vld [vmem:[%s199] sm:$0xff]
        %v242 = vld [vmem:[%s199 + $0x8] sm:$0xff]
        %v243 = vld [vmem:[%s199 + $0x10] sm:$0xff]
        %v244 = vld [vmem:[%s199 + $0x18] sm:$0xff]
        %v245 = vld [vmem:[%s199 + $0x20] sm:$0xff]
        %v246 = vld [vmem:[%s199 + $0x28] sm:$0xff]
        %v247 = vld [vmem:[%s199 + $0x30] sm:$0xff]
        %v248 = vld [vmem:[%s199 + $0x38] sm:$0xff]
        %v249 = vld [vmem:[%s199 + $0x40] sm:$0xff]
        %v250 = vld [vmem:[%s199 + $0x48] sm:$0xff]
        %v251 = vld [vmem:[%s199 + $0x50] sm:$0xff]
        %v252 = vld [vmem:[%s199 + $0x58] sm:$0xff]
        %v253 = vld [vmem:[%s199 + $0x60] sm:$0xff]
        %v254 = vld [vmem:[%s199 + $0x68] sm:$0xff]
        %v255 = vld [vmem:[%s199 + $0x70] sm:$0xff]
        %v256 = vld [vmem:[%s199 + $0x78] sm:$0xff]
        %v257 = vld [vmem:[%s199 + $0x80] sm:$0xff]
        %v258 = vld [vmem:[%s199 + $0x88] sm:$0xff]
        %v259 = vld [vmem:[%s199 + $0x90] sm:$0xff]
        %v260 = vld [vmem:[%s199 + $0x98] sm:$0xff]
        %v261 = vld [vmem:[%s199 + $0xa0] sm:$0xff]
        %v262 = vld [vmem:[%s199 + $0xa8] sm:$0xff]
        %v263 = vld [vmem:[%s199 + $0xb0] sm:$0xff]
        %v264 = vld [vmem:[%s199 + $0xb8] sm:$0xff]
        %v265 = vld [vmem:[%s199 + $0xc0] sm:$0xff]
        %v266 = vld [vmem:[%s199 + $0xc8] sm:$0xff]
        %v267 = vld [vmem:[%s199 + $0xd0] sm:$0xff]
        %v268 = vld [vmem:[%s199 + $0xd8] sm:$0xff]
        %v269 = vld [vmem:[%s199 + $0xe0] sm:$0xff]
        %v270 = vld [vmem:[%s199 + $0xe8] sm:$0xff]
        %v271 = vld [vmem:[%s199 + $0xf0] sm:$0xff]
        %v272 = vld [vmem:[%s199 + $0xf8] sm:$0xff]
        %v273 = vld [vmem:[%s199 + $0x100] sm:$0xff]
        %v274 = vld [vmem:[%s199 + $0x108] sm:$0xff]
        %v275 = vld [vmem:[%s199 + $0x110] sm:$0xff]
        %v276 = vld [vmem:[%s199 + $0x118] sm:$0xff]
        %v277 = vld [vmem:[%s199 + $0x120] sm:$0xff]
        %v278 = vld [vmem:[%s199 + $0x128] sm:$0xff]
        %v279 = vld [vmem:[%s199 + $0x130] sm:$0xff]
        %v280 = vld [vmem:[%s199 + $0x138] sm:$0xff]
        %v281 = vld [vmem:[%s199 + $0x140] sm:$0xff]
        %v282 = vld [vmem:[%s199 + $0x148] sm:$0xff]
        %v283 = vld [vmem:[%s199 + $0x150] sm:$0xff]
        %v284 = vld [vmem:[%s199 + $0x158] sm:$0xff]
        %v285 = vld [vmem:[%s199 + $0x160] sm:$0xff]
        %v286 = vld [vmem:[%s199 + $0x168] sm:$0xff]
        %v287 = vld [vmem:[%s199 + $0x170] sm:$0xff]
        %v288 = vld [vmem:[%s199 + $0x178] sm:$0xff]
        %v289 = vld [vmem:[%s199 + $0x180] sm:$0xff]
        %v290 = vld [vmem:[%s199 + $0x188] sm:$0xff]
        %v291 = vld [vmem:[%s199 + $0x190] sm:$0xff]
        %v292 = vld [vmem:[%s199 + $0x198] sm:$0xff]
        %v293 = vld [vmem:[%s199 + $0x1a0] sm:$0xff]
        %v294 = vld [vmem:[%s199 + $0x1a8] sm:$0xff]
        %v295 = vld [vmem:[%s199 + $0x1b0] sm:$0xff]
        %v296 = vld [vmem:[%s199 + $0x1b8] sm:$0xff]
        %v297 = vld [vmem:[%s199 + $0x1c0] sm:$0xff]
        %v298 = vld [vmem:[%s199 + $0x1c8] sm:$0xff]
        %v299 = vld [vmem:[%s199 + $0x1d0] sm:$0xff]
        %v300 = vld [vmem:[%s199 + $0x1d8] sm:$0xff]
        %v301 = vld [vmem:[%s199 + $0x1e0] sm:$0xff]
        %v302 = vld [vmem:[%s199 + $0x1e8] sm:$0xff]
        %v303 = vld [vmem:[%s199 + $0x1f0] sm:$0xff]
        %v304 = vld [vmem:[%s199 + $0x1f8] sm:$0xff]
        %v305 = vld [vmem:[%s199 + $0x200] sm:$0xff]
        %v306 = vld [vmem:[%s199 + $0x208] sm:$0xff]
        %v307 = vld [vmem:[%s199 + $0x210] sm:$0xff]
        %v308 = vld [vmem:[%s199 + $0x218] sm:$0xff]
        %v309 = vld [vmem:[%s199 + $0x220] sm:$0xff]
        %v310 = vld [vmem:[%s199 + $0x228] sm:$0xff]
        %v311 = vld [vmem:[%s199 + $0x230] sm:$0xff]
        %v312 = vld [vmem:[%s199 + $0x238] sm:$0xff]
        %v313 = vld [vmem:[%s199 + $0x240] sm:$0xff]
        %v314 = vld [vmem:[%s199 + $0x248] sm:$0xff]
        %v315 = vld [vmem:[%s199 + $0x250] sm:$0xff]
        %v316 = vld [vmem:[%s199 + $0x258] sm:$0xff]
        %v317 = vld [vmem:[%s199 + $0x260] sm:$0xff]
        %v318 = vld [vmem:[%s199 + $0x268] sm:$0xff]
        %v319 = vld [vmem:[%s199 + $0x270] sm:$0xff]
        %v320 = vld [vmem:[%s199 + $0x278] sm:$0xff]
        %v321 = vld [vmem:[%s199 + $0x280] sm:$0xff]
        %v322 = vld [vmem:[%s199 + $0x288] sm:$0xff]
        %v323 = vld [vmem:[%s199 + $0x290] sm:$0xff]
        %v324 = vld [vmem:[%s199 + $0x298] sm:$0xff]
        %v325 = vld [vmem:[%s199 + $0x2a0] sm:$0xff]
        %v326 = vld [vmem:[%s199 + $0x2a8] sm:$0xff]
        %v327 = vld [vmem:[%s199 + $0x2b0] sm:$0xff]
        %v328 = vld [vmem:[%s199 + $0x2b8] sm:$0xff]
        %v329 = vld [vmem:[%s199 + $0x2c0] sm:$0xff]
        %v330 = vld [vmem:[%s199 + $0x2c8] sm:$0xff]
        %v331 = vld [vmem:[%s199 + $0x2d0] sm:$0xff]
        %v332 = vld [vmem:[%s199 + $0x2d8] sm:$0xff]
        %v333 = vld [vmem:[%s199 + $0x2e0] sm:$0xff]
        %v334 = vld [vmem:[%s199 + $0x2e8] sm:$0xff]
        %v335 = vld [vmem:[%s199 + $0x2f0] sm:$0xff]
        %v336 = vld [vmem:[%s199 + $0x2f8] sm:$0xff]
        %v337 = vld [vmem:[%s199 + $0x300] sm:$0xff]
        %v338 = vld [vmem:[%s199 + $0x308] sm:$0xff]
        %v339 = vld [vmem:[%s199 + $0x310] sm:$0xff]
        %v340 = vld [vmem:[%s199 + $0x318] sm:$0xff]
        %v341 = vld [vmem:[%s199 + $0x320] sm:$0xff]
        %v342 = vld [vmem:[%s199 + $0x328] sm:$0xff]
        %v343 = vld [vmem:[%s199 + $0x330] sm:$0xff]
        %v344 = vld [vmem:[%s199 + $0x338] sm:$0xff]
        %v345 = vld [vmem:[%s199 + $0x340] sm:$0xff]
        %v346 = vld [vmem:[%s199 + $0x348] sm:$0xff]
        %v347 = vld [vmem:[%s199 + $0x350] sm:$0xff]
        %v348 = vld [vmem:[%s199 + $0x358] sm:$0xff]
        %v349 = vld [vmem:[%s199 + $0x360] sm:$0xff]
        %v350 = vld [vmem:[%s199 + $0x368] sm:$0xff]
        %v351 = vld [vmem:[%s199 + $0x370] sm:$0xff]
        %v352 = vld [vmem:[%s199 + $0x378] sm:$0xff]
        %v353 = vld [vmem:[%s199 + $0x380] sm:$0xff]
        %v354 = vld [vmem:[%s199 + $0x388] sm:$0xff]
        %v355 = vld [vmem:[%s199 + $0x390] sm:$0xff]
        %v356 = vld [vmem:[%s199 + $0x398] sm:$0xff]
        %v357 = vld [vmem:[%s199 + $0x3a0] sm:$0xff]
        %v358 = vld [vmem:[%s199 + $0x3a8] sm:$0xff]
        %v359 = vld [vmem:[%s199 + $0x3b0] sm:$0xff]
        %v360 = vld [vmem:[%s199 + $0x3b8] sm:$0xff]
        %v361 = vld [vmem:[%s199 + $0x3c0] sm:$0xff]
        %v362 = vld [vmem:[%s199 + $0x3c8] sm:$0xff]
        %v363 = vld [vmem:[%s199 + $0x3d0] sm:$0xff]
        %v364 = vld [vmem:[%s199 + $0x3d8] sm:$0xff]
        %v365 = vld [vmem:[%s199 + $0x3e0] sm:$0xff]
        %v366 = vld [vmem:[%s199 + $0x3e8] sm:$0xff]
        %v367 = vld [vmem:[%s199 + $0x3f0] sm:$0xff]
        %v368 = vld [vmem:[%s199 + $0x3f8] sm:$0xff]
        %v369 = vld [vmem:[%s199 + $0x400] sm:$0xff]
        %v370 = vld [vmem:[%s199 + $0x408] sm:$0xff]
        %v371 = vld [vmem:[%s199 + $0x410] sm:$0xff]
        %v372 = vld [vmem:[%s199 + $0x418] sm:$0xff]
        %v373 = vld [vmem:[%s199 + $0x420] sm:$0xff]
        %v374 = vld [vmem:[%s199 + $0x428] sm:$0xff]
        %v375 = vld [vmem:[%s199 + $0x430] sm:$0xff]
        %v376 = vld [vmem:[%s199 + $0x438] sm:$0xff]
        %v377 = vld [vmem:[%s199 + $0x440] sm:$0xff]
        %v378 = vld [vmem:[%s199 + $0x448] sm:$0xff]
        %v379 = vld [vmem:[%s199 + $0x450] sm:$0xff]
        %v380 = vld [vmem:[%s199 + $0x458] sm:$0xff]
        %v381 = vld [vmem:[%s199 + $0x460] sm:$0xff]
        %v382 = vld [vmem:[%s199 + $0x468] sm:$0xff]
        %v383 = vld [vmem:[%s199 + $0x470] sm:$0xff]
        %v384 = vld [vmem:[%s199 + $0x478] sm:$0xff]
        %v385 = vld [vmem:[%s199 + $0x480] sm:$0xff]
        %v386 = vld [vmem:[%s199 + $0x488] sm:$0xff]
        %v387 = vld [vmem:[%s199 + $0x490] sm:$0xff]
        %v388 = vld [vmem:[%s199 + $0x498] sm:$0xff]
        %v389 = vld [vmem:[%s199 + $0x4a0] sm:$0xff]
        %v390 = vld [vmem:[%s199 + $0x4a8] sm:$0xff]
        %v391 = vld [vmem:[%s199 + $0x4b0] sm:$0xff]
        %v392 = vld [vmem:[%s199 + $0x4b8] sm:$0xff]
        %v393 = vld [vmem:[%s199 + $0x4c0] sm:$0xff]
        %v394 = vld [vmem:[%s199 + $0x4c8] sm:$0xff]
        %v395 = vld [vmem:[%s199 + $0x4d0] sm:$0xff]
        %v396 = vld [vmem:[%s199 + $0x4d8] sm:$0xff]
        %v397 = vld [vmem:[%s199 + $0x4e0] sm:$0xff]
        %v398 = vld [vmem:[%s199 + $0x4e8] sm:$0xff]
        %v399 = vld [vmem:[%s199 + $0x4f0] sm:$0xff]
        %v400 = vld [vmem:[%s199 + $0x4f8] sm:$0xff]
        %v401 = vld [vmem:[%s199 + $0x500] sm:$0xff]
        %v402 = vld [vmem:[%s199 + $0x508] sm:$0xff]
        %v403 = vld [vmem:[%s199 + $0x510] sm:$0xff]
        %v404 = vld [vmem:[%s199 + $0x518] sm:$0xff]
        %v405 = vld [vmem:[%s199 + $0x520] sm:$0xff]
        %v406 = vld [vmem:[%s199 + $0x528] sm:$0xff]
        %v407 = vld [vmem:[%s199 + $0x530] sm:$0xff]
        %v408 = vld [vmem:[%s199 + $0x538] sm:$0xff]
        %v409 = vld [vmem:[%s199 + $0x540] sm:$0xff]
        %v410 = vld [vmem:[%s199 + $0x548] sm:$0xff]
        %v411 = vld [vmem:[%s199 + $0x550] sm:$0xff]
        %v412 = vld [vmem:[%s199 + $0x558] sm:$0xff]
        %v413 = vld [vmem:[%s199 + $0x560] sm:$0xff]
        %v414 = vld [vmem:[%s199 + $0x568] sm:$0xff]
        %v415 = vld [vmem:[%s199 + $0x570] sm:$0xff]
        %v416 = vld [vmem:[%s199 + $0x578] sm:$0xff]
        %v417 = vld [vmem:[%s199 + $0x580] sm:$0xff]
        %v418 = vld [vmem:[%s199 + $0x588] sm:$0xff]
        %v419 = vld [vmem:[%s199 + $0x590] sm:$0xff]
        %v420 = vld [vmem:[%s199 + $0x598] sm:$0xff]
        %v421 = vld [vmem:[%s199 + $0x5a0] sm:$0xff]
        %v422 = vld [vmem:[%s199 + $0x5a8] sm:$0xff]
        %v423 = vld [vmem:[%s199 + $0x5b0] sm:$0xff]
        %v424 = vld [vmem:[%s199 + $0x5b8] sm:$0xff]
        %v425 = vld [vmem:[%s199 + $0x5c0] sm:$0xff]
        %v426 = vld [vmem:[%s199 + $0x5c8] sm:$0xff]
        %v427 = vld [vmem:[%s199 + $0x5d0] sm:$0xff]
        %v428 = vld [vmem:[%s199 + $0x5d8] sm:$0xff]
        %v429 = vld [vmem:[%s199 + $0x5e0] sm:$0xff]
        %v430 = vld [vmem:[%s199 + $0x5e8] sm:$0xff]
        %v431 = vld [vmem:[%s199 + $0x5f0] sm:$0xff]
        %v432 = vld [vmem:[%s199 + $0x5f8] sm:$0xff]
        %v433 = vld [vmem:[%s199 + $0x600] sm:$0xff]
        %v434 = vld [vmem:[%s199 + $0x608] sm:$0xff]
        %v435 = vld [vmem:[%s199 + $0x610] sm:$0xff]
        %v436 = vld [vmem:[%s199 + $0x618] sm:$0xff]
        %v437 = vld [vmem:[%s199 + $0x620] sm:$0xff]
        %v438 = vld [vmem:[%s199 + $0x628] sm:$0xff]
        %v439 = vld [vmem:[%s199 + $0x630] sm:$0xff]
        %v440 = vld [vmem:[%s199 + $0x638] sm:$0xff]
        %v441 = vld [vmem:[%s199 + $0x640] sm:$0xff]
        %v442 = vld [vmem:[%s199 + $0x648] sm:$0xff]
        %v443 = vld [vmem:[%s199 + $0x650] sm:$0xff]
        %v444 = vld [vmem:[%s199 + $0x658] sm:$0xff]
        %v445 = vld [vmem:[%s199 + $0x660] sm:$0xff]
        %v446 = vld [vmem:[%s199 + $0x668] sm:$0xff]
        %v447 = vld [vmem:[%s199 + $0x670] sm:$0xff]
        %v448 = vld [vmem:[%s199 + $0x678] sm:$0xff]
        %v449 = vld [vmem:[%s199 + $0x680] sm:$0xff]
        %v450 = vld [vmem:[%s199 + $0x688] sm:$0xff]
        %v451 = vld [vmem:[%s199 + $0x690] sm:$0xff]
        %v452 = vld [vmem:[%s199 + $0x698] sm:$0xff]
        %v453 = vld [vmem:[%s199 + $0x6a0] sm:$0xff]
        %v454 = vld [vmem:[%s199 + $0x6a8] sm:$0xff]
        %v455 = vld [vmem:[%s199 + $0x6b0] sm:$0xff]
        %v456 = vld [vmem:[%s199 + $0x6b8] sm:$0xff]
        %v457 = vld [vmem:[%s199 + $0x6c0] sm:$0xff]
        %v458 = vld [vmem:[%s199 + $0x6c8] sm:$0xff]
        %v459 = vld [vmem:[%s199 + $0x6d0] sm:$0xff]
        %v460 = vld [vmem:[%s199 + $0x6d8] sm:$0xff]
        %v461 = vld [vmem:[%s199 + $0x6e0] sm:$0xff]
        %v462 = vld [vmem:[%s199 + $0x6e8] sm:$0xff]
        %v463 = vld [vmem:[%s199 + $0x6f0] sm:$0xff]
        %v464 = vld [vmem:[%s199 + $0x6f8] sm:$0xff]
        %v465 = vld [vmem:[%s199 + $0x700] sm:$0xff]
        %v466 = vld [vmem:[%s199 + $0x708] sm:$0xff]
        %v467 = vld [vmem:[%s199 + $0x710] sm:$0xff]
        %v468 = vld [vmem:[%s199 + $0x718] sm:$0xff]
        %v469 = vld [vmem:[%s199 + $0x720] sm:$0xff]
        %v470 = vld [vmem:[%s199 + $0x728] sm:$0xff]
        %v471 = vld [vmem:[%s199 + $0x730] sm:$0xff]
        %v472 = vld [vmem:[%s199 + $0x738] sm:$0xff]
        %v473 = vld [vmem:[%s199 + $0x740] sm:$0xff]
        %v474 = vld [vmem:[%s199 + $0x748] sm:$0xff]
        %v475 = vld [vmem:[%s199 + $0x750] sm:$0xff]
        %v476 = vld [vmem:[%s199 + $0x758] sm:$0xff]
        %v477 = vld [vmem:[%s199 + $0x760] sm:$0xff]
        %v478 = vld [vmem:[%s199 + $0x768] sm:$0xff]
        %v479 = vld [vmem:[%s199 + $0x770] sm:$0xff]
        %v480 = vld [vmem:[%s199 + $0x778] sm:$0xff]
        %v481 = vld [vmem:[%s199 + $0x780] sm:$0xff]
        %v482 = vld [vmem:[%s199 + $0x788] sm:$0xff]
        %v483 = vld [vmem:[%s199 + $0x790] sm:$0xff]
        %v484 = vld [vmem:[%s199 + $0x798] sm:$0xff]
        %v485 = vld [vmem:[%s199 + $0x7a0] sm:$0xff]
        %v486 = vld [vmem:[%s199 + $0x7a8] sm:$0xff]
        %v487 = vld [vmem:[%s199 + $0x7b0] sm:$0xff]
        %v488 = vld [vmem:[%s199 + $0x7b8] sm:$0xff]
        %v489 = vld [vmem:[%s199 + $0x7c0] sm:$0xff]
        %v490 = vld [vmem:[%s199 + $0x7c8] sm:$0xff]
        %v491 = vld [vmem:[%s199 + $0x7d0] sm:$0xff]
        %v492 = vld [vmem:[%s199 + $0x7d8] sm:$0xff]
        %v493 = vld [vmem:[%s199 + $0x7e0] sm:$0xff]
        %v494 = vld [vmem:[%s199 + $0x7e8] sm:$0xff]
        %v495 = vld [vmem:[%s199 + $0x7f0] sm:$0xff]
        %v496 = vld [vmem:[%s199 + $0x7f8] sm:$0xff]
        %v753 = vunpack.c.l.b16 %v241
        %v754 = vunpack.c.h.b16 %v241
        %v755 = vunpack.c.l.b16 %v242
        %v756 = vunpack.c.h.b16 %v242
        %v757 = vunpack.c.l.b16 %v243
        %v758 = vunpack.c.h.b16 %v243
        %v759 = vunpack.c.l.b16 %v244
        %v760 = vunpack.c.h.b16 %v244
        %v761 = vunpack.c.l.b16 %v245
        %v762 = vunpack.c.h.b16 %v245
        %v763 = vunpack.c.l.b16 %v246
        %v764 = vunpack.c.h.b16 %v246
        %v765 = vunpack.c.l.b16 %v247
        %v766 = vunpack.c.h.b16 %v247
        %v767 = vunpack.c.l.b16 %v248
        %v768 = vunpack.c.h.b16 %v248
        %v769 = vunpack.c.l.b16 %v249
        %v770 = vunpack.c.h.b16 %v249
        %v771 = vunpack.c.l.b16 %v250
        %v772 = vunpack.c.h.b16 %v250
        %v773 = vunpack.c.l.b16 %v251
        %v774 = vunpack.c.h.b16 %v251
        %v775 = vunpack.c.l.b16 %v252
        %v776 = vunpack.c.h.b16 %v252
        %v777 = vunpack.c.l.b16 %v253
        %v778 = vunpack.c.h.b16 %v253
        %v779 = vunpack.c.l.b16 %v254
        %v780 = vunpack.c.h.b16 %v254
        %v781 = vunpack.c.l.b16 %v255
        %v782 = vunpack.c.h.b16 %v255
        %v783 = vunpack.c.l.b16 %v256
        %v784 = vunpack.c.h.b16 %v256
        %v785 = vunpack.c.l.b16 %v257
        %v786 = vunpack.c.h.b16 %v257
        %v787 = vunpack.c.l.b16 %v258
        %v788 = vunpack.c.h.b16 %v258
        %v789 = vunpack.c.l.b16 %v259
        %v790 = vunpack.c.h.b16 %v259
        %v791 = vunpack.c.l.b16 %v260
        %v792 = vunpack.c.h.b16 %v260
        %v793 = vunpack.c.l.b16 %v261
        %v794 = vunpack.c.h.b16 %v261
        %v795 = vunpack.c.l.b16 %v262
        %v796 = vunpack.c.h.b16 %v262
        %v797 = vunpack.c.l.b16 %v263
        %v798 = vunpack.c.h.b16 %v263
        %v799 = vunpack.c.l.b16 %v264
        %v800 = vunpack.c.h.b16 %v264
        %v801 = vunpack.c.l.b16 %v265
        %v802 = vunpack.c.h.b16 %v265
        %v803 = vunpack.c.l.b16 %v266
        %v804 = vunpack.c.h.b16 %v266
        %v805 = vunpack.c.l.b16 %v267
        %v806 = vunpack.c.h.b16 %v267
        %v807 = vunpack.c.l.b16 %v268
        %v808 = vunpack.c.h.b16 %v268
        %v809 = vunpack.c.l.b16 %v269
        %v810 = vunpack.c.h.b16 %v269
        %v811 = vunpack.c.l.b16 %v270
        %v812 = vunpack.c.h.b16 %v270
        %v813 = vunpack.c.l.b16 %v271
        %v814 = vunpack.c.h.b16 %v271
        %v815 = vunpack.c.l.b16 %v272
        %v816 = vunpack.c.h.b16 %v272
        %v817 = vunpack.c.l.b16 %v273
        %v818 = vunpack.c.h.b16 %v273
        %v819 = vunpack.c.l.b16 %v274
        %v820 = vunpack.c.h.b16 %v274
        %v821 = vunpack.c.l.b16 %v275
        %v822 = vunpack.c.h.b16 %v275
        %v823 = vunpack.c.l.b16 %v276
        %v824 = vunpack.c.h.b16 %v276
        %v825 = vunpack.c.l.b16 %v277
        %v826 = vunpack.c.h.b16 %v277
        %v827 = vunpack.c.l.b16 %v278
        %v828 = vunpack.c.h.b16 %v278
        %v829 = vunpack.c.l.b16 %v279
        %v830 = vunpack.c.h.b16 %v279
        %v831 = vunpack.c.l.b16 %v280
        %v832 = vunpack.c.h.b16 %v280
        %v833 = vunpack.c.l.b16 %v281
        %v834 = vunpack.c.h.b16 %v281
        %v835 = vunpack.c.l.b16 %v282
        %v836 = vunpack.c.h.b16 %v282
        %v837 = vunpack.c.l.b16 %v283
        %v838 = vunpack.c.h.b16 %v283
        %v839 = vunpack.c.l.b16 %v284
        %v840 = vunpack.c.h.b16 %v284
        %v841 = vunpack.c.l.b16 %v285
        %v842 = vunpack.c.h.b16 %v285
        %v843 = vunpack.c.l.b16 %v286
        %v844 = vunpack.c.h.b16 %v286
        %v845 = vunpack.c.l.b16 %v287
        %v846 = vunpack.c.h.b16 %v287
        %v847 = vunpack.c.l.b16 %v288
        %v848 = vunpack.c.h.b16 %v288
        %v849 = vunpack.c.l.b16 %v289
        %v850 = vunpack.c.h.b16 %v289
        %v851 = vunpack.c.l.b16 %v290
        %v852 = vunpack.c.h.b16 %v290
        %v853 = vunpack.c.l.b16 %v291
        %v854 = vunpack.c.h.b16 %v291
        %v855 = vunpack.c.l.b16 %v292
        %v856 = vunpack.c.h.b16 %v292
        %v857 = vunpack.c.l.b16 %v293
        %v858 = vunpack.c.h.b16 %v293
        %v859 = vunpack.c.l.b16 %v294
        %v860 = vunpack.c.h.b16 %v294
        %v861 = vunpack.c.l.b16 %v295
        %v862 = vunpack.c.h.b16 %v295
        %v863 = vunpack.c.l.b16 %v296
        %v864 = vunpack.c.h.b16 %v296
        %v865 = vunpack.c.l.b16 %v297
        %v866 = vunpack.c.h.b16 %v297
        %v867 = vunpack.c.l.b16 %v298
        %v868 = vunpack.c.h.b16 %v298
        %v869 = vunpack.c.l.b16 %v299
        %v870 = vunpack.c.h.b16 %v299
        %v871 = vunpack.c.l.b16 %v300
        %v872 = vunpack.c.h.b16 %v300
        %v873 = vunpack.c.l.b16 %v301
        %v874 = vunpack.c.h.b16 %v301
        %v875 = vunpack.c.l.b16 %v302
        %v876 = vunpack.c.h.b16 %v302
        %v877 = vunpack.c.l.b16 %v303
        %v878 = vunpack.c.h.b16 %v303
        %v879 = vunpack.c.l.b16 %v304
        %v880 = vunpack.c.h.b16 %v304
        %v881 = vunpack.c.l.b16 %v305
        %v882 = vunpack.c.h.b16 %v305
        %v883 = vunpack.c.l.b16 %v306
        %v884 = vunpack.c.h.b16 %v306
        %v885 = vunpack.c.l.b16 %v307
        %v886 = vunpack.c.h.b16 %v307
        %v887 = vunpack.c.l.b16 %v308
        %v888 = vunpack.c.h.b16 %v308
        %v889 = vunpack.c.l.b16 %v309
        %v890 = vunpack.c.h.b16 %v309
        %v891 = vunpack.c.l.b16 %v310
        %v892 = vunpack.c.h.b16 %v310
        %v893 = vunpack.c.l.b16 %v311
        %v894 = vunpack.c.h.b16 %v311
        %v895 = vunpack.c.l.b16 %v312
        %v896 = vunpack.c.h.b16 %v312
        %v897 = vunpack.c.l.b16 %v313
        %v898 = vunpack.c.h.b16 %v313
        %v899 = vunpack.c.l.b16 %v314
        %v900 = vunpack.c.h.b16 %v314
        %v901 = vunpack.c.l.b16 %v315
        %v902 = vunpack.c.h.b16 %v315
        %v903 = vunpack.c.l.b16 %v316
        %v904 = vunpack.c.h.b16 %v316
        %v905 = vunpack.c.l.b16 %v317
        %v906 = vunpack.c.h.b16 %v317
        %v907 = vunpack.c.l.b16 %v318
        %v908 = vunpack.c.h.b16 %v318
        %v909 = vunpack.c.l.b16 %v319
        %v910 = vunpack.c.h.b16 %v319
        %v911 = vunpack.c.l.b16 %v320
        %v912 = vunpack.c.h.b16 %v320
        %v913 = vunpack.c.l.b16 %v321
        %v914 = vunpack.c.h.b16 %v321
        %v915 = vunpack.c.l.b16 %v322
        %v916 = vunpack.c.h.b16 %v322
        %v917 = vunpack.c.l.b16 %v323
        %v918 = vunpack.c.h.b16 %v323
        %v919 = vunpack.c.l.b16 %v324
        %v920 = vunpack.c.h.b16 %v324
        %v921 = vunpack.c.l.b16 %v325
        %v922 = vunpack.c.h.b16 %v325
        %v923 = vunpack.c.l.b16 %v326
        %v924 = vunpack.c.h.b16 %v326
        %v925 = vunpack.c.l.b16 %v327
        %v926 = vunpack.c.h.b16 %v327
        %v927 = vunpack.c.l.b16 %v328
        %v928 = vunpack.c.h.b16 %v328
        %v929 = vunpack.c.l.b16 %v329
        %v930 = vunpack.c.h.b16 %v329
        %v931 = vunpack.c.l.b16 %v330
        %v932 = vunpack.c.h.b16 %v330
        %v933 = vunpack.c.l.b16 %v331
        %v934 = vunpack.c.h.b16 %v331
        %v935 = vunpack.c.l.b16 %v332
        %v936 = vunpack.c.h.b16 %v332
        %v937 = vunpack.c.l.b16 %v333
        %v938 = vunpack.c.h.b16 %v333
        %v939 = vunpack.c.l.b16 %v334
        %v940 = vunpack.c.h.b16 %v334
        %v941 = vunpack.c.l.b16 %v335
        %v942 = vunpack.c.h.b16 %v335
        %v943 = vunpack.c.l.b16 %v336
        %v944 = vunpack.c.h.b16 %v336
        %v945 = vunpack.c.l.b16 %v337
        %v946 = vunpack.c.h.b16 %v337
        %v947 = vunpack.c.l.b16 %v338
        %v948 = vunpack.c.h.b16 %v338
        %v949 = vunpack.c.l.b16 %v339
        %v950 = vunpack.c.h.b16 %v339
        %v951 = vunpack.c.l.b16 %v340
        %v952 = vunpack.c.h.b16 %v340
        %v953 = vunpack.c.l.b16 %v341
        %v954 = vunpack.c.h.b16 %v341
        %v955 = vunpack.c.l.b16 %v342
        %v956 = vunpack.c.h.b16 %v342
        %v957 = vunpack.c.l.b16 %v343
        %v958 = vunpack.c.h.b16 %v343
        %v959 = vunpack.c.l.b16 %v344
        %v960 = vunpack.c.h.b16 %v344
        %v961 = vunpack.c.l.b16 %v345
        %v962 = vunpack.c.h.b16 %v345
        %v963 = vunpack.c.l.b16 %v346
        %v964 = vunpack.c.h.b16 %v346
        %v965 = vunpack.c.l.b16 %v347
        %v966 = vunpack.c.h.b16 %v347
        %v967 = vunpack.c.l.b16 %v348
        %v968 = vunpack.c.h.b16 %v348
        %v969 = vunpack.c.l.b16 %v349
        %v970 = vunpack.c.h.b16 %v349
        %v971 = vunpack.c.l.b16 %v350
        %v972 = vunpack.c.h.b16 %v350
        %v973 = vunpack.c.l.b16 %v351
        %v974 = vunpack.c.h.b16 %v351
        %v975 = vunpack.c.l.b16 %v352
        %v976 = vunpack.c.h.b16 %v352
        %v977 = vunpack.c.l.b16 %v353
        %v978 = vunpack.c.h.b16 %v353
        %v979 = vunpack.c.l.b16 %v354
        %v980 = vunpack.c.h.b16 %v354
        %v981 = vunpack.c.l.b16 %v355
        %v982 = vunpack.c.h.b16 %v355
        %v983 = vunpack.c.l.b16 %v356
        %v984 = vunpack.c.h.b16 %v356
        %v985 = vunpack.c.l.b16 %v357
        %v986 = vunpack.c.h.b16 %v357
        %v987 = vunpack.c.l.b16 %v358
        %v988 = vunpack.c.h.b16 %v358
        %v989 = vunpack.c.l.b16 %v359
        %v990 = vunpack.c.h.b16 %v359
        %v991 = vunpack.c.l.b16 %v360
        %v992 = vunpack.c.h.b16 %v360
        %v993 = vunpack.c.l.b16 %v361
        %v994 = vunpack.c.h.b16 %v361
        %v995 = vunpack.c.l.b16 %v362
        %v996 = vunpack.c.h.b16 %v362
        %v997 = vunpack.c.l.b16 %v363
        %v998 = vunpack.c.h.b16 %v363
        %v999 = vunpack.c.l.b16 %v364
        %v1000 = vunpack.c.h.b16 %v364
        %v1001 = vunpack.c.l.b16 %v365
        %v1002 = vunpack.c.h.b16 %v365
        %v1003 = vunpack.c.l.b16 %v366
        %v1004 = vunpack.c.h.b16 %v366
        %v1005 = vunpack.c.l.b16 %v367
        %v1006 = vunpack.c.h.b16 %v367
        %v1007 = vunpack.c.l.b16 %v368
        %v1008 = vunpack.c.h.b16 %v368
        %v1009 = vunpack.c.l.b16 %v369
        %v1010 = vunpack.c.h.b16 %v369
        %v1011 = vunpack.c.l.b16 %v370
        %v1012 = vunpack.c.h.b16 %v370
        %v1013 = vunpack.c.l.b16 %v371
        %v1014 = vunpack.c.h.b16 %v371
        %v1015 = vunpack.c.l.b16 %v372
        %v1016 = vunpack.c.h.b16 %v372
        %v1017 = vunpack.c.l.b16 %v373
        %v1018 = vunpack.c.h.b16 %v373
        %v1019 = vunpack.c.l.b16 %v374
        %v1020 = vunpack.c.h.b16 %v374
        %v1021 = vunpack.c.l.b16 %v375
        %v1022 = vunpack.c.h.b16 %v375
        %v1023 = vunpack.c.l.b16 %v376
        %v1024 = vunpack.c.h.b16 %v376
        %v1025 = vunpack.c.l.b16 %v377
        %v1026 = vunpack.c.h.b16 %v377
        %v1027 = vunpack.c.l.b16 %v378
        %v1028 = vunpack.c.h.b16 %v378
        %v1029 = vunpack.c.l.b16 %v379
        %v1030 = vunpack.c.h.b16 %v379
        %v1031 = vunpack.c.l.b16 %v380
        %v1032 = vunpack.c.h.b16 %v380
        %v1033 = vunpack.c.l.b16 %v381
        %v1034 = vunpack.c.h.b16 %v381
        %v1035 = vunpack.c.l.b16 %v382
        %v1036 = vunpack.c.h.b16 %v382
        %v1037 = vunpack.c.l.b16 %v383
        %v1038 = vunpack.c.h.b16 %v383
        %v1039 = vunpack.c.l.b16 %v384
        %v1040 = vunpack.c.h.b16 %v384
        %v1041 = vunpack.c.l.b16 %v385
        %v1042 = vunpack.c.h.b16 %v385
        %v1043 = vunpack.c.l.b16 %v386
        %v1044 = vunpack.c.h.b16 %v386
        %v1045 = vunpack.c.l.b16 %v387
        %v1046 = vunpack.c.h.b16 %v387
        %v1047 = vunpack.c.l.b16 %v388
        %v1048 = vunpack.c.h.b16 %v388
        %v1049 = vunpack.c.l.b16 %v389
        %v1050 = vunpack.c.h.b16 %v389
        %v1051 = vunpack.c.l.b16 %v390
        %v1052 = vunpack.c.h.b16 %v390
        %v1053 = vunpack.c.l.b16 %v391
        %v1054 = vunpack.c.h.b16 %v391
        %v1055 = vunpack.c.l.b16 %v392
        %v1056 = vunpack.c.h.b16 %v392
        %v1057 = vunpack.c.l.b16 %v393
        %v1058 = vunpack.c.h.b16 %v393
        %v1059 = vunpack.c.l.b16 %v394
        %v1060 = vunpack.c.h.b16 %v394
        %v1061 = vunpack.c.l.b16 %v395
        %v1062 = vunpack.c.h.b16 %v395
        %v1063 = vunpack.c.l.b16 %v396
        %v1064 = vunpack.c.h.b16 %v396
        %v1065 = vunpack.c.l.b16 %v397
        %v1066 = vunpack.c.h.b16 %v397
        %v1067 = vunpack.c.l.b16 %v398
        %v1068 = vunpack.c.h.b16 %v398
        %v1069 = vunpack.c.l.b16 %v399
        %v1070 = vunpack.c.h.b16 %v399
        %v1071 = vunpack.c.l.b16 %v400
        %v1072 = vunpack.c.h.b16 %v400
        %v1073 = vunpack.c.l.b16 %v401
        %v1074 = vunpack.c.h.b16 %v401
        %v1075 = vunpack.c.l.b16 %v402
        %v1076 = vunpack.c.h.b16 %v402
        %v1077 = vunpack.c.l.b16 %v403
        %v1078 = vunpack.c.h.b16 %v403
        %v1079 = vunpack.c.l.b16 %v404
        %v1080 = vunpack.c.h.b16 %v404
        %v1081 = vunpack.c.l.b16 %v405
        %v1082 = vunpack.c.h.b16 %v405
        %v1083 = vunpack.c.l.b16 %v406
        %v1084 = vunpack.c.h.b16 %v406
        %v1085 = vunpack.c.l.b16 %v407
        %v1086 = vunpack.c.h.b16 %v407
        %v1087 = vunpack.c.l.b16 %v408
        %v1088 = vunpack.c.h.b16 %v408
        %v1089 = vunpack.c.l.b16 %v409
        %v1090 = vunpack.c.h.b16 %v409
        %v1091 = vunpack.c.l.b16 %v410
        %v1092 = vunpack.c.h.b16 %v410
        %v1093 = vunpack.c.l.b16 %v411
        %v1094 = vunpack.c.h.b16 %v411
        %v1095 = vunpack.c.l.b16 %v412
        %v1096 = vunpack.c.h.b16 %v412
        %v1097 = vunpack.c.l.b16 %v413
        %v1098 = vunpack.c.h.b16 %v413
        %v1099 = vunpack.c.l.b16 %v414
        %v1100 = vunpack.c.h.b16 %v414
        %v1101 = vunpack.c.l.b16 %v415
        %v1102 = vunpack.c.h.b16 %v415
        %v1103 = vunpack.c.l.b16 %v416
        %v1104 = vunpack.c.h.b16 %v416
        %v1105 = vunpack.c.l.b16 %v417
        %v1106 = vunpack.c.h.b16 %v417
        %v1107 = vunpack.c.l.b16 %v418
        %v1108 = vunpack.c.h.b16 %v418
        %v1109 = vunpack.c.l.b16 %v419
        %v1110 = vunpack.c.h.b16 %v419
        %v1111 = vunpack.c.l.b16 %v420
        %v1112 = vunpack.c.h.b16 %v420
        %v1113 = vunpack.c.l.b16 %v421
        %v1114 = vunpack.c.h.b16 %v421
        %v1115 = vunpack.c.l.b16 %v422
        %v1116 = vunpack.c.h.b16 %v422
        %v1117 = vunpack.c.l.b16 %v423
        %v1118 = vunpack.c.h.b16 %v423
        %v1119 = vunpack.c.l.b16 %v424
        %v1120 = vunpack.c.h.b16 %v424
        %v1121 = vunpack.c.l.b16 %v425
        %v1122 = vunpack.c.h.b16 %v425
        %v1123 = vunpack.c.l.b16 %v426
        %v1124 = vunpack.c.h.b16 %v426
        %v1125 = vunpack.c.l.b16 %v427
        %v1126 = vunpack.c.h.b16 %v427
        %v1127 = vunpack.c.l.b16 %v428
        %v1128 = vunpack.c.h.b16 %v428
        %v1129 = vunpack.c.l.b16 %v429
        %v1130 = vunpack.c.h.b16 %v429
        %v1131 = vunpack.c.l.b16 %v430
        %v1132 = vunpack.c.h.b16 %v430
        %v1133 = vunpack.c.l.b16 %v431
        %v1134 = vunpack.c.h.b16 %v431
        %v1135 = vunpack.c.l.b16 %v432
        %v1136 = vunpack.c.h.b16 %v432
        %v1137 = vunpack.c.l.b16 %v433
        %v1138 = vunpack.c.h.b16 %v433
        %v1139 = vunpack.c.l.b16 %v434
        %v1140 = vunpack.c.h.b16 %v434
        %v1141 = vunpack.c.l.b16 %v435
        %v1142 = vunpack.c.h.b16 %v435
        %v1143 = vunpack.c.l.b16 %v436
        %v1144 = vunpack.c.h.b16 %v436
        %v1145 = vunpack.c.l.b16 %v437
        %v1146 = vunpack.c.h.b16 %v437
        %v1147 = vunpack.c.l.b16 %v438
        %v1148 = vunpack.c.h.b16 %v438
        %v1149 = vunpack.c.l.b16 %v439
        %v1150 = vunpack.c.h.b16 %v439
        %v1151 = vunpack.c.l.b16 %v440
        %v1152 = vunpack.c.h.b16 %v440
        %v1153 = vunpack.c.l.b16 %v441
        %v1154 = vunpack.c.h.b16 %v441
        %v1155 = vunpack.c.l.b16 %v442
        %v1156 = vunpack.c.h.b16 %v442
        %v1157 = vunpack.c.l.b16 %v443
        %v1158 = vunpack.c.h.b16 %v443
        %v1159 = vunpack.c.l.b16 %v444
        %v1160 = vunpack.c.h.b16 %v444
        %v1161 = vunpack.c.l.b16 %v445
        %v1162 = vunpack.c.h.b16 %v445
        %v1163 = vunpack.c.l.b16 %v446
        %v1164 = vunpack.c.h.b16 %v446
        %v1165 = vunpack.c.l.b16 %v447
        %v1166 = vunpack.c.h.b16 %v447
        %v1167 = vunpack.c.l.b16 %v448
        %v1168 = vunpack.c.h.b16 %v448
        %v1169 = vunpack.c.l.b16 %v449
        %v1170 = vunpack.c.h.b16 %v449
        %v1171 = vunpack.c.l.b16 %v450
        %v1172 = vunpack.c.h.b16 %v450
        %v1173 = vunpack.c.l.b16 %v451
        %v1174 = vunpack.c.h.b16 %v451
        %v1175 = vunpack.c.l.b16 %v452
        %v1176 = vunpack.c.h.b16 %v452
        %v1177 = vunpack.c.l.b16 %v453
        %v1178 = vunpack.c.h.b16 %v453
        %v1179 = vunpack.c.l.b16 %v454
        %v1180 = vunpack.c.h.b16 %v454
        %v1181 = vunpack.c.l.b16 %v455
        %v1182 = vunpack.c.h.b16 %v455
        %v1183 = vunpack.c.l.b16 %v456
        %v1184 = vunpack.c.h.b16 %v456
        %v1185 = vunpack.c.l.b16 %v457
        %v1186 = vunpack.c.h.b16 %v457
        %v1187 = vunpack.c.l.b16 %v458
        %v1188 = vunpack.c.h.b16 %v458
        %v1189 = vunpack.c.l.b16 %v459
        %v1190 = vunpack.c.h.b16 %v459
        %v1191 = vunpack.c.l.b16 %v460
        %v1192 = vunpack.c.h.b16 %v460
        %v1193 = vunpack.c.l.b16 %v461
        %v1194 = vunpack.c.h.b16 %v461
        %v1195 = vunpack.c.l.b16 %v462
        %v1196 = vunpack.c.h.b16 %v462
        %v1197 = vunpack.c.l.b16 %v463
        %v1198 = vunpack.c.h.b16 %v463
        %v1199 = vunpack.c.l.b16 %v464
        %v1200 = vunpack.c.h.b16 %v464
        %v1201 = vunpack.c.l.b16 %v465
        %v1202 = vunpack.c.h.b16 %v465
        %v1203 = vunpack.c.l.b16 %v466
        %v1204 = vunpack.c.h.b16 %v466
        %v1205 = vunpack.c.l.b16 %v467
        %v1206 = vunpack.c.h.b16 %v467
        %v1207 = vunpack.c.l.b16 %v468
        %v1208 = vunpack.c.h.b16 %v468
        %v1209 = vunpack.c.l.b16 %v469
        %v1210 = vunpack.c.h.b16 %v469
        %v1211 = vunpack.c.l.b16 %v470
        %v1212 = vunpack.c.h.b16 %v470
        %v1213 = vunpack.c.l.b16 %v471
        %v1214 = vunpack.c.h.b16 %v471
        %v1215 = vunpack.c.l.b16 %v472
        %v1216 = vunpack.c.h.b16 %v472
        %v1217 = vunpack.c.l.b16 %v473
        %v1218 = vunpack.c.h.b16 %v473
        %v1219 = vunpack.c.l.b16 %v474
        %v1220 = vunpack.c.h.b16 %v474
        %v1221 = vunpack.c.l.b16 %v475
        %v1222 = vunpack.c.h.b16 %v475
        %v1223 = vunpack.c.l.b16 %v476
        %v1224 = vunpack.c.h.b16 %v476
        %v1225 = vunpack.c.l.b16 %v477
        %v1226 = vunpack.c.h.b16 %v477
        %v1227 = vunpack.c.l.b16 %v478
        %v1228 = vunpack.c.h.b16 %v478
        %v1229 = vunpack.c.l.b16 %v479
        %v1230 = vunpack.c.h.b16 %v479
        %v1231 = vunpack.c.l.b16 %v480
        %v1232 = vunpack.c.h.b16 %v480
        %v1233 = vunpack.c.l.b16 %v481
        %v1234 = vunpack.c.h.b16 %v481
        %v1235 = vunpack.c.l.b16 %v482
        %v1236 = vunpack.c.h.b16 %v482
        %v1237 = vunpack.c.l.b16 %v483
        %v1238 = vunpack.c.h.b16 %v483
        %v1239 = vunpack.c.l.b16 %v484
        %v1240 = vunpack.c.h.b16 %v484
        %v1241 = vunpack.c.l.b16 %v485
        %v1242 = vunpack.c.h.b16 %v485
        %v1243 = vunpack.c.l.b16 %v486
        %v1244 = vunpack.c.h.b16 %v486
        %v1245 = vunpack.c.l.b16 %v487
        %v1246 = vunpack.c.h.b16 %v487
        %v1247 = vunpack.c.l.b16 %v488
        %v1248 = vunpack.c.h.b16 %v488
        %v1249 = vunpack.c.l.b16 %v489
        %v1250 = vunpack.c.h.b16 %v489
        %v1251 = vunpack.c.l.b16 %v490
        %v1252 = vunpack.c.h.b16 %v490
        %v1253 = vunpack.c.l.b16 %v491
        %v1254 = vunpack.c.h.b16 %v491
        %v1255 = vunpack.c.l.b16 %v492
        %v1256 = vunpack.c.h.b16 %v492
        %v1257 = vunpack.c.l.b16 %v493
        %v1258 = vunpack.c.h.b16 %v493
        %v1259 = vunpack.c.l.b16 %v494
        %v1260 = vunpack.c.h.b16 %v494
        %v1261 = vunpack.c.l.b16 %v495
        %v1262 = vunpack.c.h.b16 %v495
        %v1263 = vunpack.c.l.b16 %v496
        %v1264 = vunpack.c.h.b16 %v496
        %v1265 = vpack.c.b16 %v785, %v753
        %v1266 = vpack.c.b16 %v786, %v754
        %v1267 = vpack.c.b16 %v787, %v755
        %v1268 = vpack.c.b16 %v788, %v756
        %v1269 = vpack.c.b16 %v789, %v757
        %v1270 = vpack.c.b16 %v790, %v758
        %v1271 = vpack.c.b16 %v791, %v759
        %v1272 = vpack.c.b16 %v792, %v760
        %v1273 = vpack.c.b16 %v793, %v761
        %v1274 = vpack.c.b16 %v794, %v762
        %v1275 = vpack.c.b16 %v795, %v763
        %v1276 = vpack.c.b16 %v796, %v764
        %v1277 = vpack.c.b16 %v797, %v765
        %v1278 = vpack.c.b16 %v798, %v766
        %v1279 = vpack.c.b16 %v799, %v767
        %v1280 = vpack.c.b16 %v800, %v768
        %v1281 = vpack.c.b16 %v801, %v769
        %v1282 = vpack.c.b16 %v802, %v770
        %v1283 = vpack.c.b16 %v803, %v771
        %v1284 = vpack.c.b16 %v804, %v772
        %v1285 = vpack.c.b16 %v805, %v773
        %v1286 = vpack.c.b16 %v806, %v774
        %v1287 = vpack.c.b16 %v807, %v775
        %v1288 = vpack.c.b16 %v808, %v776
        %v1289 = vpack.c.b16 %v809, %v777
        %v1290 = vpack.c.b16 %v810, %v778
        %v1291 = vpack.c.b16 %v811, %v779
        %v1292 = vpack.c.b16 %v812, %v780
        %v1293 = vpack.c.b16 %v813, %v781
        %v1294 = vpack.c.b16 %v814, %v782
        %v1295 = vpack.c.b16 %v815, %v783
        %v1296 = vpack.c.b16 %v816, %v784
        %v1297 = vpack.c.b16 %v849, %v817
        %v1298 = vpack.c.b16 %v850, %v818
        %v1299 = vpack.c.b16 %v851, %v819
        %v1300 = vpack.c.b16 %v852, %v820
        %v1301 = vpack.c.b16 %v853, %v821
        %v1302 = vpack.c.b16 %v854, %v822
        %v1303 = vpack.c.b16 %v855, %v823
        %v1304 = vpack.c.b16 %v856, %v824
        %v1305 = vpack.c.b16 %v857, %v825
        %v1306 = vpack.c.b16 %v858, %v826
        %v1307 = vpack.c.b16 %v859, %v827
        %v1308 = vpack.c.b16 %v860, %v828
        %v1309 = vpack.c.b16 %v861, %v829
        %v1310 = vpack.c.b16 %v862, %v830
        %v1311 = vpack.c.b16 %v863, %v831
        %v1312 = vpack.c.b16 %v864, %v832
        %v1313 = vpack.c.b16 %v865, %v833
        %v1314 = vpack.c.b16 %v866, %v834
        %v1315 = vpack.c.b16 %v867, %v835
        %v1316 = vpack.c.b16 %v868, %v836
        %v1317 = vpack.c.b16 %v869, %v837
        %v1318 = vpack.c.b16 %v870, %v838
        %v1319 = vpack.c.b16 %v871, %v839
        %v1320 = vpack.c.b16 %v872, %v840
        %v1321 = vpack.c.b16 %v873, %v841
        %v1322 = vpack.c.b16 %v874, %v842
        %v1323 = vpack.c.b16 %v875, %v843
        %v1324 = vpack.c.b16 %v876, %v844
        %v1325 = vpack.c.b16 %v877, %v845
        %v1326 = vpack.c.b16 %v878, %v846
        %v1327 = vpack.c.b16 %v879, %v847
        %v1328 = vpack.c.b16 %v880, %v848
        %v1329 = vpack.c.b16 %v913, %v881
        %v1330 = vpack.c.b16 %v914, %v882
        %v1331 = vpack.c.b16 %v915, %v883
        %v1332 = vpack.c.b16 %v916, %v884
        %v1333 = vpack.c.b16 %v917, %v885
        %v1334 = vpack.c.b16 %v918, %v886
        %v1335 = vpack.c.b16 %v919, %v887
        %v1336 = vpack.c.b16 %v920, %v888
        %v1337 = vpack.c.b16 %v921, %v889
        %v1338 = vpack.c.b16 %v922, %v890
        %v1339 = vpack.c.b16 %v923, %v891
        %v1340 = vpack.c.b16 %v924, %v892
        %v1341 = vpack.c.b16 %v925, %v893
        %v1342 = vpack.c.b16 %v926, %v894
        %v1343 = vpack.c.b16 %v927, %v895
        %v1344 = vpack.c.b16 %v928, %v896
        %v1345 = vpack.c.b16 %v929, %v897
        %v1346 = vpack.c.b16 %v930, %v898
        %v1347 = vpack.c.b16 %v931, %v899
        %v1348 = vpack.c.b16 %v932, %v900
        %v1349 = vpack.c.b16 %v933, %v901
        %v1350 = vpack.c.b16 %v934, %v902
        %v1351 = vpack.c.b16 %v935, %v903
        %v1352 = vpack.c.b16 %v936, %v904
        %v1353 = vpack.c.b16 %v937, %v905
        %v1354 = vpack.c.b16 %v938, %v906
        %v1355 = vpack.c.b16 %v939, %v907
        %v1356 = vpack.c.b16 %v940, %v908
        %v1357 = vpack.c.b16 %v941, %v909
        %v1358 = vpack.c.b16 %v942, %v910
        %v1359 = vpack.c.b16 %v943, %v911
        %v1360 = vpack.c.b16 %v944, %v912
        %v1361 = vpack.c.b16 %v977, %v945
        %v1362 = vpack.c.b16 %v978, %v946
        %v1363 = vpack.c.b16 %v979, %v947
        %v1364 = vpack.c.b16 %v980, %v948
        %v1365 = vpack.c.b16 %v981, %v949
        %v1366 = vpack.c.b16 %v982, %v950
        %v1367 = vpack.c.b16 %v983, %v951
        %v1368 = vpack.c.b16 %v984, %v952
        %v1369 = vpack.c.b16 %v985, %v953
        %v1370 = vpack.c.b16 %v986, %v954
        %v1371 = vpack.c.b16 %v987, %v955
        %v1372 = vpack.c.b16 %v988, %v956
        %v1373 = vpack.c.b16 %v989, %v957
        %v1374 = vpack.c.b16 %v990, %v958
        %v1375 = vpack.c.b16 %v991, %v959
        %v1376 = vpack.c.b16 %v992, %v960
        %v1377 = vpack.c.b16 %v993, %v961
        %v1378 = vpack.c.b16 %v994, %v962
        %v1379 = vpack.c.b16 %v995, %v963
        %v1380 = vpack.c.b16 %v996, %v964
        %v1381 = vpack.c.b16 %v997, %v965
        %v1382 = vpack.c.b16 %v998, %v966
        %v1383 = vpack.c.b16 %v999, %v967
        %v1384 = vpack.c.b16 %v1000, %v968
        %v1385 = vpack.c.b16 %v1001, %v969
        %v1386 = vpack.c.b16 %v1002, %v970
        %v1387 = vpack.c.b16 %v1003, %v971
        %v1388 = vpack.c.b16 %v1004, %v972
        %v1389 = vpack.c.b16 %v1005, %v973
        %v1390 = vpack.c.b16 %v1006, %v974
        %v1391 = vpack.c.b16 %v1007, %v975
        %v1392 = vpack.c.b16 %v1008, %v976
        %v1393 = vpack.c.b16 %v1041, %v1009
        %v1394 = vpack.c.b16 %v1042, %v1010
        %v1395 = vpack.c.b16 %v1043, %v1011
        %v1396 = vpack.c.b16 %v1044, %v1012
        %v1397 = vpack.c.b16 %v1045, %v1013
        %v1398 = vpack.c.b16 %v1046, %v1014
        %v1399 = vpack.c.b16 %v1047, %v1015
        %v1400 = vpack.c.b16 %v1048, %v1016
        %v1401 = vpack.c.b16 %v1049, %v1017
        %v1402 = vpack.c.b16 %v1050, %v1018
        %v1403 = vpack.c.b16 %v1051, %v1019
        %v1404 = vpack.c.b16 %v1052, %v1020
        %v1405 = vpack.c.b16 %v1053, %v1021
        %v1406 = vpack.c.b16 %v1054, %v1022
        %v1407 = vpack.c.b16 %v1055, %v1023
        %v1408 = vpack.c.b16 %v1056, %v1024
        %v1409 = vpack.c.b16 %v1057, %v1025
        %v1410 = vpack.c.b16 %v1058, %v1026
        %v1411 = vpack.c.b16 %v1059, %v1027
        %v1412 = vpack.c.b16 %v1060, %v1028
        %v1413 = vpack.c.b16 %v1061, %v1029
        %v1414 = vpack.c.b16 %v1062, %v1030
        %v1415 = vpack.c.b16 %v1063, %v1031
        %v1416 = vpack.c.b16 %v1064, %v1032
        %v1417 = vpack.c.b16 %v1065, %v1033
        %v1418 = vpack.c.b16 %v1066, %v1034
        %v1419 = vpack.c.b16 %v1067, %v1035
        %v1420 = vpack.c.b16 %v1068, %v1036
        %v1421 = vpack.c.b16 %v1069, %v1037
        %v1422 = vpack.c.b16 %v1070, %v1038
        %v1423 = vpack.c.b16 %v1071, %v1039
        %v1424 = vpack.c.b16 %v1072, %v1040
        %v1425 = vpack.c.b16 %v1105, %v1073
        %v1426 = vpack.c.b16 %v1106, %v1074
        %v1427 = vpack.c.b16 %v1107, %v1075
        %v1428 = vpack.c.b16 %v1108, %v1076
        %v1429 = vpack.c.b16 %v1109, %v1077
        %v1430 = vpack.c.b16 %v1110, %v1078
        %v1431 = vpack.c.b16 %v1111, %v1079
        %v1432 = vpack.c.b16 %v1112, %v1080
        %v1433 = vpack.c.b16 %v1113, %v1081
        %v1434 = vpack.c.b16 %v1114, %v1082
        %v1435 = vpack.c.b16 %v1115, %v1083
        %v1436 = vpack.c.b16 %v1116, %v1084
        %v1437 = vpack.c.b16 %v1117, %v1085
        %v1438 = vpack.c.b16 %v1118, %v1086
        %v1439 = vpack.c.b16 %v1119, %v1087
        %v1440 = vpack.c.b16 %v1120, %v1088
        %v1441 = vpack.c.b16 %v1121, %v1089
        %v1442 = vpack.c.b16 %v1122, %v1090
        %v1443 = vpack.c.b16 %v1123, %v1091
        %v1444 = vpack.c.b16 %v1124, %v1092
        %v1445 = vpack.c.b16 %v1125, %v1093
        %v1446 = vpack.c.b16 %v1126, %v1094
        %v1447 = vpack.c.b16 %v1127, %v1095
        %v1448 = vpack.c.b16 %v1128, %v1096
        %v1449 = vpack.c.b16 %v1129, %v1097
        %v1450 = vpack.c.b16 %v1130, %v1098
        %v1451 = vpack.c.b16 %v1131, %v1099
        %v1452 = vpack.c.b16 %v1132, %v1100
        %v1453 = vpack.c.b16 %v1133, %v1101
        %v1454 = vpack.c.b16 %v1134, %v1102
        %v1455 = vpack.c.b16 %v1135, %v1103
        %v1456 = vpack.c.b16 %v1136, %v1104
        %v1457 = vpack.c.b16 %v1169, %v1137
        %v1458 = vpack.c.b16 %v1170, %v1138
        %v1459 = vpack.c.b16 %v1171, %v1139
        %v1460 = vpack.c.b16 %v1172, %v1140
        %v1461 = vpack.c.b16 %v1173, %v1141
        %v1462 = vpack.c.b16 %v1174, %v1142
        %v1463 = vpack.c.b16 %v1175, %v1143
        %v1464 = vpack.c.b16 %v1176, %v1144
        %v1465 = vpack.c.b16 %v1177, %v1145
        %v1466 = vpack.c.b16 %v1178, %v1146
        %v1467 = vpack.c.b16 %v1179, %v1147
        %v1468 = vpack.c.b16 %v1180, %v1148
        %v1469 = vpack.c.b16 %v1181, %v1149
        %v1470 = vpack.c.b16 %v1182, %v1150
        %v1471 = vpack.c.b16 %v1183, %v1151
        %v1472 = vpack.c.b16 %v1184, %v1152
        %v1473 = vpack.c.b16 %v1185, %v1153
        %v1474 = vpack.c.b16 %v1186, %v1154
        %v1475 = vpack.c.b16 %v1187, %v1155
        %v1476 = vpack.c.b16 %v1188, %v1156
        %v1477 = vpack.c.b16 %v1189, %v1157
        %v1478 = vpack.c.b16 %v1190, %v1158
        %v1479 = vpack.c.b16 %v1191, %v1159
        %v1480 = vpack.c.b16 %v1192, %v1160
        %v1481 = vpack.c.b16 %v1193, %v1161
        %v1482 = vpack.c.b16 %v1194, %v1162
        %v1483 = vpack.c.b16 %v1195, %v1163
        %v1484 = vpack.c.b16 %v1196, %v1164
        %v1485 = vpack.c.b16 %v1197, %v1165
        %v1486 = vpack.c.b16 %v1198, %v1166
        %v1487 = vpack.c.b16 %v1199, %v1167
        %v1488 = vpack.c.b16 %v1200, %v1168
        %v1489 = vpack.c.b16 %v1233, %v1201
        %v1490 = vpack.c.b16 %v1234, %v1202
        %v1491 = vpack.c.b16 %v1235, %v1203
        %v1492 = vpack.c.b16 %v1236, %v1204
        %v1493 = vpack.c.b16 %v1237, %v1205
        %v1494 = vpack.c.b16 %v1238, %v1206
        %v1495 = vpack.c.b16 %v1239, %v1207
        %v1496 = vpack.c.b16 %v1240, %v1208
        %v1497 = vpack.c.b16 %v1241, %v1209
        %v1498 = vpack.c.b16 %v1242, %v1210
        %v1499 = vpack.c.b16 %v1243, %v1211
        %v1500 = vpack.c.b16 %v1244, %v1212
        %v1501 = vpack.c.b16 %v1245, %v1213
        %v1502 = vpack.c.b16 %v1246, %v1214
        %v1503 = vpack.c.b16 %v1247, %v1215
        %v1504 = vpack.c.b16 %v1248, %v1216
        %v1505 = vpack.c.b16 %v1249, %v1217
        %v1506 = vpack.c.b16 %v1250, %v1218
        %v1507 = vpack.c.b16 %v1251, %v1219
        %v1508 = vpack.c.b16 %v1252, %v1220
        %v1509 = vpack.c.b16 %v1253, %v1221
        %v1510 = vpack.c.b16 %v1254, %v1222
        %v1511 = vpack.c.b16 %v1255, %v1223
        %v1512 = vpack.c.b16 %v1256, %v1224
        %v1513 = vpack.c.b16 %v1257, %v1225
        %v1514 = vpack.c.b16 %v1258, %v1226
        %v1515 = vpack.c.b16 %v1259, %v1227
        %v1516 = vpack.c.b16 %v1260, %v1228
        %v1517 = vpack.c.b16 %v1261, %v1229
        %v1518 = vpack.c.b16 %v1262, %v1230
        %v1519 = vpack.c.b16 %v1263, %v1231
        %v1520 = vpack.c.b16 %v1264, %v1232
        %1777 = vmatprep.subr.bf16.mxu0 %v1266
        %1778 = vmatpush1.bf16.msra.mxu0 %v1265
        %1779 = vmatprep.subr.bf16.mxu0 %v1298
        %1780 = vmatpush1.bf16.msra.mxu0 %v1297
        %1781 = vmatprep.subr.bf16.mxu0 %v1330
        %1782 = vmatpush1.bf16.msra.mxu0 %v1329
        %1783 = vmatprep.subr.bf16.mxu0 %v1362
        %1784 = vmatpush1.bf16.msra.mxu0 %v1361
        %1785 = vmatprep.subr.bf16.mxu0 %v1394
        %1786 = vmatpush1.bf16.msra.mxu0 %v1393
        %1787 = vmatprep.subr.bf16.mxu0 %v1426
        %1788 = vmatpush1.bf16.msra.mxu0 %v1425
        %1789 = vmatprep.subr.bf16.mxu0 %v1458
        %1790 = vmatpush1.bf16.msra.mxu0 %v1457
        %1791 = vmatprep.subr.bf16.mxu0 %v1490
        %1792 = vmatpush1.bf16.msra.mxu0 %v1489
        %1793 = vmatprep.subr.bf16.mxu0 0
        %1794 = vmatpush1.bf16.msra.mxu0 0
        %1795 = vmatprep.subr.bf16.mxu0 0
        %1796 = vmatpush1.bf16.msra.mxu0 0
        %1797 = vmatprep.subr.bf16.mxu0 0
        %1798 = vmatpush1.bf16.msra.mxu0 0
        %1799 = vmatprep.subr.bf16.mxu0 0
        %1800 = vmatpush1.bf16.msra.mxu0 0
        %1801 = vmatprep.subr.bf16.mxu0 0
        %1802 = vmatpush1.bf16.msra.mxu0 0
        %1803 = vmatprep.subr.bf16.mxu0 0
        %1804 = vmatpush1.bf16.msra.mxu0 0
        %1805 = vmatprep.subr.bf16.mxu0 0
        %1806 = vmatpush1.bf16.msra.mxu0 0
        %1807 = vmatprep.subr.bf16.mxu0 0
        %1808 = vmatpush1.bf16.msra.mxu0 0
        %1809 = vmatprep.mubr.bf16.mxu0 0
        %1810 = vmatmul.mubr.bf16.gmra.mrb[0].mxu0 %v240
        %v1811 = vpop.f32.mrb[0].mxu0
        %v1812 = vadd.f32 0.0, %v1811
        %v1813 = vpop.f32.mrb[0].mxu0
        %v1814 = vadd.f32 0.0, %v1813
        %v1815 = vpop.f32.mrb[0].mxu0
        %v1816 = vpop.f32.mrb[0].mxu0
        %1817 = vdwg.mxu0
        %1818 = vmatprep.subr.bf16.mxu0 %v1268
        %1819 = vmatpush1.bf16.msra.mxu0 %v1267
        %1820 = vmatprep.subr.bf16.mxu0 %v1300
        %1821 = vmatpush1.bf16.msra.mxu0 %v1299
        %1822 = vmatprep.subr.bf16.mxu0 %v1332
        %1823 = vmatpush1.bf16.msra.mxu0 %v1331
        %1824 = vmatprep.subr.bf16.mxu0 %v1364
        %1825 = vmatpush1.bf16.msra.mxu0 %v1363
        %1826 = vmatprep.subr.bf16.mxu0 %v1396
        %1827 = vmatpush1.bf16.msra.mxu0 %v1395
        %1828 = vmatprep.subr.bf16.mxu0 %v1428
        %1829 = vmatpush1.bf16.msra.mxu0 %v1427
        %1830 = vmatprep.subr.bf16.mxu0 %v1460
        %1831 = vmatpush1.bf16.msra.mxu0 %v1459
        %1832 = vmatprep.subr.bf16.mxu0 %v1492
        %1833 = vmatpush1.bf16.msra.mxu0 %v1491
        %1834 = vmatprep.subr.bf16.mxu0 0
        %1835 = vmatpush1.bf16.msra.mxu0 0
        %1836 = vmatprep.subr.bf16.mxu0 0
        %1837 = vmatpush1.bf16.msra.mxu0 0
        %1838 = vmatprep.subr.bf16.mxu0 0
        %1839 = vmatpush1.bf16.msra.mxu0 0
        %1840 = vmatprep.subr.bf16.mxu0 0
        %1841 = vmatpush1.bf16.msra.mxu0 0
        %1842 = vmatprep.subr.bf16.mxu0 0
        %1843 = vmatpush1.bf16.msra.mxu0 0
        %1844 = vmatprep.subr.bf16.mxu0 0
        %1845 = vmatpush1.bf16.msra.mxu0 0
        %1846 = vmatprep.subr.bf16.mxu0 0
        %1847 = vmatpush1.bf16.msra.mxu0 0
        %1848 = vmatprep.subr.bf16.mxu0 0
        %1849 = vmatpush1.bf16.msra.mxu0 0
        %1850 = vmatprep.mubr.bf16.mxu0 0
        %1851 = vmatmul.mubr.bf16.gmra.mrb[0].mxu0 %v240
        %v1852 = vpop.f32.mrb[0].mxu0
        %v1853 = vadd.f32 0.0, %v1852
        %v1854 = vpop.f32.mrb[0].mxu0
        %v1855 = vadd.f32 0.0, %v1854
        %v1856 = vpop.f32.mrb[0].mxu0
        %v1857 = vpop.f32.mrb[0].mxu0
        %1858 = vdwg.mxu0
        %1859 = vmatprep.subr.bf16.mxu0 %v1270
        %1860 = vmatpush1.bf16.msra.mxu0 %v1269
        %1861 = vmatprep.subr.bf16.mxu0 %v1302
        %1862 = vmatpush1.bf16.msra.mxu0 %v1301
        %1863 = vmatprep.subr.bf16.mxu0 %v1334
        %1864 = vmatpush1.bf16.msra.mxu0 %v1333
        %1865 = vmatprep.subr.bf16.mxu0 %v1366
        %1866 = vmatpush1.bf16.msra.mxu0 %v1365
        %1867 = vmatprep.subr.bf16.mxu0 %v1398
        %1868 = vmatpush1.bf16.msra.mxu0 %v1397
        %1869 = vmatprep.subr.bf16.mxu0 %v1430
        %1870 = vmatpush1.bf16.msra.mxu0 %v1429
        %1871 = vmatprep.subr.bf16.mxu0 %v1462
        %1872 = vmatpush1.bf16.msra.mxu0 %v1461
        %1873 = vmatprep.subr.bf16.mxu0 %v1494
        %1874 = vmatpush1.bf16.msra.mxu0 %v1493
        %1875 = vmatprep.subr.bf16.mxu0 0
        %1876 = vmatpush1.bf16.msra.mxu0 0
        %1877 = vmatprep.subr.bf16.mxu0 0
        %1878 = vmatpush1.bf16.msra.mxu0 0
        %1879 = vmatprep.subr.bf16.mxu0 0
        %1880 = vmatpush1.bf16.msra.mxu0 0
        %1881 = vmatprep.subr.bf16.mxu0 0
        %1882 = vmatpush1.bf16.msra.mxu0 0
        %1883 = vmatprep.subr.bf16.mxu0 0
        %1884 = vmatpush1.bf16.msra.mxu0 0
        %1885 = vmatprep.subr.bf16.mxu0 0
        %1886 = vmatpush1.bf16.msra.mxu0 0
        %1887 = vmatprep.subr.bf16.mxu0 0
        %1888 = vmatpush1.bf16.msra.mxu0 0
        %1889 = vmatprep.subr.bf16.mxu0 0
        %1890 = vmatpush1.bf16.msra.mxu0 0
        %1891 = vmatprep.mubr.bf16.mxu0 0
        %1892 = vmatmul.mubr.bf16.gmra.mrb[0].mxu0 %v240
        %v1893 = vpop.f32.mrb[0].mxu0
        %v1894 = vadd.f32 0.0, %v1893
        %v1895 = vpop.f32.mrb[0].mxu0
        %v1896 = vadd.f32 0.0, %v1895
        %v1897 = vpop.f32.mrb[0].mxu0
        %v1898 = vpop.f32.mrb[0].mxu0
        %1899 = vdwg.mxu0
        %1900 = vmatprep.subr.bf16.mxu0 %v1272
        %1901 = vmatpush1.bf16.msra.mxu0 %v1271
        %1902 = vmatprep.subr.bf16.mxu0 %v1304
        %1903 = vmatpush1.bf16.msra.mxu0 %v1303
        %1904 = vmatprep.subr.bf16.mxu0 %v1336
        %1905 = vmatpush1.bf16.msra.mxu0 %v1335
        %1906 = vmatprep.subr.bf16.mxu0 %v1368
        %1907 = vmatpush1.bf16.msra.mxu0 %v1367
        %1908 = vmatprep.subr.bf16.mxu0 %v1400
        %1909 = vmatpush1.bf16.msra.mxu0 %v1399
        %1910 = vmatprep.subr.bf16.mxu0 %v1432
        %1911 = vmatpush1.bf16.msra.mxu0 %v1431
        %1912 = vmatprep.subr.bf16.mxu0 %v1464
        %1913 = vmatpush1.bf16.msra.mxu0 %v1463
        %1914 = vmatprep.subr.bf16.mxu0 %v1496
        %1915 = vmatpush1.bf16.msra.mxu0 %v1495
        %1916 = vmatprep.subr.bf16.mxu0 0
        %1917 = vmatpush1.bf16.msra.mxu0 0
        %1918 = vmatprep.subr.bf16.mxu0 0
        %1919 = vmatpush1.bf16.msra.mxu0 0
        %1920 = vmatprep.subr.bf16.mxu0 0
        %1921 = vmatpush1.bf16.msra.mxu0 0
        %1922 = vmatprep.subr.bf16.mxu0 0
        %1923 = vmatpush1.bf16.msra.mxu0 0
        %1924 = vmatprep.subr.bf16.mxu0 0
        %1925 = vmatpush1.bf16.msra.mxu0 0
        %1926 = vmatprep.subr.bf16.mxu0 0
        %1927 = vmatpush1.bf16.msra.mxu0 0
        %1928 = vmatprep.subr.bf16.mxu0 0
        %1929 = vmatpush1.bf16.msra.mxu0 0
        %1930 = vmatprep.subr.bf16.mxu0 0
        %1931 = vmatpush1.bf16.msra.mxu0 0
        %1932 = vmatprep.mubr.bf16.mxu0 0
        %1933 = vmatmul.mubr.bf16.gmra.mrb[0].mxu0 %v240
        %v1934 = vpop.f32.mrb[0].mxu0
        %v1935 = vadd.f32 0.0, %v1934
        %v1936 = vpop.f32.mrb[0].mxu0
        %v1937 = vadd.f32 0.0, %v1936
        %v1938 = vpop.f32.mrb[0].mxu0
        %v1939 = vpop.f32.mrb[0].mxu0
        %1940 = vdwg.mxu0
        %1941 = vmatprep.subr.bf16.mxu0 %v1274
        %1942 = vmatpush1.bf16.msra.mxu0 %v1273
        %1943 = vmatprep.subr.bf16.mxu0 %v1306
        %1944 = vmatpush1.bf16.msra.mxu0 %v1305
        %1945 = vmatprep.subr.bf16.mxu0 %v1338
        %1946 = vmatpush1.bf16.msra.mxu0 %v1337
        %1947 = vmatprep.subr.bf16.mxu0 %v1370
        %1948 = vmatpush1.bf16.msra.mxu0 %v1369
        %1949 = vmatprep.subr.bf16.mxu0 %v1402
        %1950 = vmatpush1.bf16.msra.mxu0 %v1401
        %1951 = vmatprep.subr.bf16.mxu0 %v1434
        %1952 = vmatpush1.bf16.msra.mxu0 %v1433
        %1953 = vmatprep.subr.bf16.mxu0 %v1466
        %1954 = vmatpush1.bf16.msra.mxu0 %v1465
        %1955 = vmatprep.subr.bf16.mxu0 %v1498
        %1956 = vmatpush1.bf16.msra.mxu0 %v1497
        %1957 = vmatprep.subr.bf16.mxu0 0
        %1958 = vmatpush1.bf16.msra.mxu0 0
        %1959 = vmatprep.subr.bf16.mxu0 0
        %1960 = vmatpush1.bf16.msra.mxu0 0
        %1961 = vmatprep.subr.bf16.mxu0 0
        %1962 = vmatpush1.bf16.msra.mxu0 0
        %1963 = vmatprep.subr.bf16.mxu0 0
        %1964 = vmatpush1.bf16.msra.mxu0 0
        %1965 = vmatprep.subr.bf16.mxu0 0
        %1966 = vmatpush1.bf16.msra.mxu0 0
        %1967 = vmatprep.subr.bf16.mxu0 0
        %1968 = vmatpush1.bf16.msra.mxu0 0
        %1969 = vmatprep.subr.bf16.mxu0 0
        %1970 = vmatpush1.bf16.msra.mxu0 0
        %1971 = vmatprep.subr.bf16.mxu0 0
        %1972 = vmatpush1.bf16.msra.mxu0 0
        %1973 = vmatprep.mubr.bf16.mxu0 0
        %1974 = vmatmul.mubr.bf16.gmra.mrb[0].mxu0 %v240
        %v1975 = vpop.f32.mrb[0].mxu0
        %v1976 = vadd.f32 0.0, %v1975
        %v1977 = vpop.f32.mrb[0].mxu0
        %v1978 = vadd.f32 0.0, %v1977
        %v1979 = vpop.f32.mrb[0].mxu0
        %v1980 = vpop.f32.mrb[0].mxu0
        %1981 = vdwg.mxu0
        %1982 = vmatprep.subr.bf16.mxu0 %v1276
        %1983 = vmatpush1.bf16.msra.mxu0 %v1275
        %1984 = vmatprep.subr.bf16.mxu0 %v1308
        %1985 = vmatpush1.bf16.msra.mxu0 %v1307
        %1986 = vmatprep.subr.bf16.mxu0 %v1340
        %1987 = vmatpush1.bf16.msra.mxu0 %v1339
        %1988 = vmatprep.subr.bf16.mxu0 %v1372
        %1989 = vmatpush1.bf16.msra.mxu0 %v1371
        %1990 = vmatprep.subr.bf16.mxu0 %v1404
        %1991 = vmatpush1.bf16.msra.mxu0 %v1403
        %1992 = vmatprep.subr.bf16.mxu0 %v1436
        %1993 = vmatpush1.bf16.msra.mxu0 %v1435
        %1994 = vmatprep.subr.bf16.mxu0 %v1468
        %1995 = vmatpush1.bf16.msra.mxu0 %v1467
        %1996 = vmatprep.subr.bf16.mxu0 %v1500
        %1997 = vmatpush1.bf16.msra.mxu0 %v1499
        %1998 = vmatprep.subr.bf16.mxu0 0
        %1999 = vmatpush1.bf16.msra.mxu0 0
        %2000 = vmatprep.subr.bf16.mxu0 0
        %2001 = vmatpush1.bf16.msra.mxu0 0
        %2002 = vmatprep.subr.bf16.mxu0 0
        %2003 = vmatpush1.bf16.msra.mxu0 0
        %2004 = vmatprep.subr.bf16.mxu0 0
        %2005 = vmatpush1.bf16.msra.mxu0 0
        %2006 = vmatprep.subr.bf16.mxu0 0
        %2007 = vmatpush1.bf16.msra.mxu0 0
        %2008 = vmatprep.subr.bf16.mxu0 0
        %2009 = vmatpush1.bf16.msra.mxu0 0
        %2010 = vmatprep.subr.bf16.mxu0 0
        %2011 = vmatpush1.bf16.msra.mxu0 0
        %2012 = vmatprep.subr.bf16.mxu0 0
        %2013 = vmatpush1.bf16.msra.mxu0 0
        %2014 = vmatprep.mubr.bf16.mxu0 0
        %2015 = vmatmul.mubr.bf16.gmra.mrb[0].mxu0 %v240
        %v2016 = vpop.f32.mrb[0].mxu0
        %v2017 = vadd.f32 0.0, %v2016
        %v2018 = vpop.f32.mrb[0].mxu0
        %v2019 = vadd.f32 0.0, %v2018
        %v2020 = vpop.f32.mrb[0].mxu0
        %v2021 = vpop.f32.mrb[0].mxu0
        %2022 = vdwg.mxu0
        %2023 = vmatprep.subr.bf16.mxu0 %v1278
        %2024 = vmatpush1.bf16.msra.mxu0 %v1277
        %2025 = vmatprep.subr.bf16.mxu0 %v1310
        %2026 = vmatpush1.bf16.msra.mxu0 %v1309
        %2027 = vmatprep.subr.bf16.mxu0 %v1342
        %2028 = vmatpush1.bf16.msra.mxu0 %v1341
        %2029 = vmatprep.subr.bf16.mxu0 %v1374
        %2030 = vmatpush1.bf16.msra.mxu0 %v1373
        %2031 = vmatprep.subr.bf16.mxu0 %v1406
        %2032 = vmatpush1.bf16.msra.mxu0 %v1405
        %2033 = vmatprep.subr.bf16.mxu0 %v1438
        %2034 = vmatpush1.bf16.msra.mxu0 %v1437
        %2035 = vmatprep.subr.bf16.mxu0 %v1470
        %2036 = vmatpush1.bf16.msra.mxu0 %v1469
        %2037 = vmatprep.subr.bf16.mxu0 %v1502
        %2038 = vmatpush1.bf16.msra.mxu0 %v1501
        %2039 = vmatprep.subr.bf16.mxu0 0
        %2040 = vmatpush1.bf16.msra.mxu0 0
        %2041 = vmatprep.subr.bf16.mxu0 0
        %2042 = vmatpush1.bf16.msra.mxu0 0
        %2043 = vmatprep.subr.bf16.mxu0 0
        %2044 = vmatpush1.bf16.msra.mxu0 0
        %2045 = vmatprep.subr.bf16.mxu0 0
        %2046 = vmatpush1.bf16.msra.mxu0 0
        %2047 = vmatprep.subr.bf16.mxu0 0
        %2048 = vmatpush1.bf16.msra.mxu0 0
        %2049 = vmatprep.subr.bf16.mxu0 0
        %2050 = vmatpush1.bf16.msra.mxu0 0
        %2051 = vmatprep.subr.bf16.mxu0 0
        %2052 = vmatpush1.bf16.msra.mxu0 0
        %2053 = vmatprep.subr.bf16.mxu0 0
        %2054 = vmatpush1.bf16.msra.mxu0 0
        %2055 = vmatprep.mubr.bf16.mxu0 0
        %2056 = vmatmul.mubr.bf16.gmra.mrb[0].mxu0 %v240
        %v2057 = vpop.f32.mrb[0].mxu0
        %v2058 = vadd.f32 0.0, %v2057
        %v2059 = vpop.f32.mrb[0].mxu0
        %v2060 = vadd.f32 0.0, %v2059
        %v2061 = vpop.f32.mrb[0].mxu0
        %v2062 = vpop.f32.mrb[0].mxu0
        %2063 = vdwg.mxu0
        %2064 = vmatprep.subr.bf16.mxu0 %v1280
        %2065 = vmatpush1.bf16.msra.mxu0 %v1279
        %2066 = vmatprep.subr.bf16.mxu0 %v1312
        %2067 = vmatpush1.bf16.msra.mxu0 %v1311
        %2068 = vmatprep.subr.bf16.mxu0 %v1344
        %2069 = vmatpush1.bf16.msra.mxu0 %v1343
        %2070 = vmatprep.subr.bf16.mxu0 %v1376
        %2071 = vmatpush1.bf16.msra.mxu0 %v1375
        %2072 = vmatprep.subr.bf16.mxu0 %v1408
        %2073 = vmatpush1.bf16.msra.mxu0 %v1407
        %2074 = vmatprep.subr.bf16.mxu0 %v1440
        %2075 = vmatpush1.bf16.msra.mxu0 %v1439
        %2076 = vmatprep.subr.bf16.mxu0 %v1472
        %2077 = vmatpush1.bf16.msra.mxu0 %v1471
        %2078 = vmatprep.subr.bf16.mxu0 %v1504
        %2079 = vmatpush1.bf16.msra.mxu0 %v1503
        %2080 = vmatprep.subr.bf16.mxu0 0
        %2081 = vmatpush1.bf16.msra.mxu0 0
        %2082 = vmatprep.subr.bf16.mxu0 0
        %2083 = vmatpush1.bf16.msra.mxu0 0
        %2084 = vmatprep.subr.bf16.mxu0 0
        %2085 = vmatpush1.bf16.msra.mxu0 0
        %2086 = vmatprep.subr.bf16.mxu0 0
        %2087 = vmatpush1.bf16.msra.mxu0 0
        %2088 = vmatprep.subr.bf16.mxu0 0
        %2089 = vmatpush1.bf16.msra.mxu0 0
        %2090 = vmatprep.subr.bf16.mxu0 0
        %2091 = vmatpush1.bf16.msra.mxu0 0
        %2092 = vmatprep.subr.bf16.mxu0 0
        %2093 = vmatpush1.bf16.msra.mxu0 0
        %2094 = vmatprep.subr.bf16.mxu0 0
        %2095 = vmatpush1.bf16.msra.mxu0 0
        %2096 = vmatprep.mubr.bf16.mxu0 0
        %2097 = vmatmul.mubr.bf16.gmra.mrb[0].mxu0 %v240
        %v2098 = vpop.f32.mrb[0].mxu0
        %v2099 = vadd.f32 0.0, %v2098
        %v2100 = vpop.f32.mrb[0].mxu0
        %v2101 = vadd.f32 0.0, %v2100
        %v2102 = vpop.f32.mrb[0].mxu0
        %v2103 = vpop.f32.mrb[0].mxu0
        %2104 = vdwg.mxu0
        %2105 = vmatprep.subr.bf16.mxu0 %v1282
        %2106 = vmatpush1.bf16.msra.mxu0 %v1281
        %2107 = vmatprep.subr.bf16.mxu0 %v1314
        %2108 = vmatpush1.bf16.msra.mxu0 %v1313
        %2109 = vmatprep.subr.bf16.mxu0 %v1346
        %2110 = vmatpush1.bf16.msra.mxu0 %v1345
        %2111 = vmatprep.subr.bf16.mxu0 %v1378
        %2112 = vmatpush1.bf16.msra.mxu0 %v1377
        %2113 = vmatprep.subr.bf16.mxu0 %v1410
        %2114 = vmatpush1.bf16.msra.mxu0 %v1409
        %2115 = vmatprep.subr.bf16.mxu0 %v1442
        %2116 = vmatpush1.bf16.msra.mxu0 %v1441
        %2117 = vmatprep.subr.bf16.mxu0 %v1474
        %2118 = vmatpush1.bf16.msra.mxu0 %v1473
        %2119 = vmatprep.subr.bf16.mxu0 %v1506
        %2120 = vmatpush1.bf16.msra.mxu0 %v1505
        %2121 = vmatprep.subr.bf16.mxu0 0
        %2122 = vmatpush1.bf16.msra.mxu0 0
        %2123 = vmatprep.subr.bf16.mxu0 0
        %2124 = vmatpush1.bf16.msra.mxu0 0
        %2125 = vmatprep.subr.bf16.mxu0 0
        %2126 = vmatpush1.bf16.msra.mxu0 0
        %2127 = vmatprep.subr.bf16.mxu0 0
        %2128 = vmatpush1.bf16.msra.mxu0 0
        %2129 = vmatprep.subr.bf16.mxu0 0
        %2130 = vmatpush1.bf16.msra.mxu0 0
        %2131 = vmatprep.subr.bf16.mxu0 0
        %2132 = vmatpush1.bf16.msra.mxu0 0
        %2133 = vmatprep.subr.bf16.mxu0 0
        %2134 = vmatpush1.bf16.msra.mxu0 0
        %2135 = vmatprep.subr.bf16.mxu0 0
        %2136 = vmatpush1.bf16.msra.mxu0 0
        %2137 = vmatprep.mubr.bf16.mxu0 0
        %2138 = vmatmul.mubr.bf16.gmra.mrb[0].mxu0 %v240
        %v2139 = vpop.f32.mrb[0].mxu0
        %v2140 = vadd.f32 0.0, %v2139
        %v2141 = vpop.f32.mrb[0].mxu0
        %v2142 = vadd.f32 0.0, %v2141
        %v2143 = vpop.f32.mrb[0].mxu0
        %v2144 = vpop.f32.mrb[0].mxu0
        %2145 = vdwg.mxu0
        %2146 = vmatprep.subr.bf16.mxu0 %v1284
        %2147 = vmatpush1.bf16.msra.mxu0 %v1283
        %2148 = vmatprep.subr.bf16.mxu0 %v1316
        %2149 = vmatpush1.bf16.msra.mxu0 %v1315
        %2150 = vmatprep.subr.bf16.mxu0 %v1348
        %2151 = vmatpush1.bf16.msra.mxu0 %v1347
        %2152 = vmatprep.subr.bf16.mxu0 %v1380
        %2153 = vmatpush1.bf16.msra.mxu0 %v1379
        %2154 = vmatprep.subr.bf16.mxu0 %v1412
        %2155 = vmatpush1.bf16.msra.mxu0 %v1411
        %2156 = vmatprep.subr.bf16.mxu0 %v1444
        %2157 = vmatpush1.bf16.msra.mxu0 %v1443
        %2158 = vmatprep.subr.bf16.mxu0 %v1476
        %2159 = vmatpush1.bf16.msra.mxu0 %v1475
        %2160 = vmatprep.subr.bf16.mxu0 %v1508
        %2161 = vmatpush1.bf16.msra.mxu0 %v1507
        %2162 = vmatprep.subr.bf16.mxu0 0
        %2163 = vmatpush1.bf16.msra.mxu0 0
        %2164 = vmatprep.subr.bf16.mxu0 0
        %2165 = vmatpush1.bf16.msra.mxu0 0
        %2166 = vmatprep.subr.bf16.mxu0 0
        %2167 = vmatpush1.bf16.msra.mxu0 0
        %2168 = vmatprep.subr.bf16.mxu0 0
        %2169 = vmatpush1.bf16.msra.mxu0 0
        %2170 = vmatprep.subr.bf16.mxu0 0
        %2171 = vmatpush1.bf16.msra.mxu0 0
        %2172 = vmatprep.subr.bf16.mxu0 0
        %2173 = vmatpush1.bf16.msra.mxu0 0
        %2174 = vmatprep.subr.bf16.mxu0 0
        %2175 = vmatpush1.bf16.msra.mxu0 0
        %2176 = vmatprep.subr.bf16.mxu0 0
        %2177 = vmatpush1.bf16.msra.mxu0 0
        %2178 = vmatprep.mubr.bf16.mxu0 0
        %2179 = vmatmul.mubr.bf16.gmra.mrb[0].mxu0 %v240
        %v2180 = vpop.f32.mrb[0].mxu0
        %v2181 = vadd.f32 0.0, %v2180
        %v2182 = vpop.f32.mrb[0].mxu0
        %v2183 = vadd.f32 0.0, %v2182
        %v2184 = vpop.f32.mrb[0].mxu0
        %v2185 = vpop.f32.mrb[0].mxu0
        %2186 = vdwg.mxu0
        %2187 = vmatprep.subr.bf16.mxu0 %v1286
        %2188 = vmatpush1.bf16.msra.mxu0 %v1285
        %2189 = vmatprep.subr.bf16.mxu0 %v1318
        %2190 = vmatpush1.bf16.msra.mxu0 %v1317
        %2191 = vmatprep.subr.bf16.mxu0 %v1350
        %2192 = vmatpush1.bf16.msra.mxu0 %v1349
        %2193 = vmatprep.subr.bf16.mxu0 %v1382
        %2194 = vmatpush1.bf16.msra.mxu0 %v1381
        %2195 = vmatprep.subr.bf16.mxu0 %v1414
        %2196 = vmatpush1.bf16.msra.mxu0 %v1413
        %2197 = vmatprep.subr.bf16.mxu0 %v1446
        %2198 = vmatpush1.bf16.msra.mxu0 %v1445
        %2199 = vmatprep.subr.bf16.mxu0 %v1478
        %2200 = vmatpush1.bf16.msra.mxu0 %v1477
        %2201 = vmatprep.subr.bf16.mxu0 %v1510
        %2202 = vmatpush1.bf16.msra.mxu0 %v1509
        %2203 = vmatprep.subr.bf16.mxu0 0
        %2204 = vmatpush1.bf16.msra.mxu0 0
        %2205 = vmatprep.subr.bf16.mxu0 0
        %2206 = vmatpush1.bf16.msra.mxu0 0
        %2207 = vmatprep.subr.bf16.mxu0 0
        %2208 = vmatpush1.bf16.msra.mxu0 0
        %2209 = vmatprep.subr.bf16.mxu0 0
        %2210 = vmatpush1.bf16.msra.mxu0 0
        %2211 = vmatprep.subr.bf16.mxu0 0
        %2212 = vmatpush1.bf16.msra.mxu0 0
        %2213 = vmatprep.subr.bf16.mxu0 0
        %2214 = vmatpush1.bf16.msra.mxu0 0
        %2215 = vmatprep.subr.bf16.mxu0 0
        %2216 = vmatpush1.bf16.msra.mxu0 0
        %2217 = vmatprep.subr.bf16.mxu0 0
        %2218 = vmatpush1.bf16.msra.mxu0 0
        %2219 = vmatprep.mubr.bf16.mxu0 0
        %2220 = vmatmul.mubr.bf16.gmra.mrb[0].mxu0 %v240
        %v2221 = vpop.f32.mrb[0].mxu0
        %v2222 = vadd.f32 0.0, %v2221
        %v2223 = vpop.f32.mrb[0].mxu0
        %v2224 = vadd.f32 0.0, %v2223
        %v2225 = vpop.f32.mrb[0].mxu0
        %v2226 = vpop.f32.mrb[0].mxu0
        %2227 = vdwg.mxu0
        %2228 = vmatprep.subr.bf16.mxu0 %v1288
        %2229 = vmatpush1.bf16.msra.mxu0 %v1287
        %2230 = vmatprep.subr.bf16.mxu0 %v1320
        %2231 = vmatpush1.bf16.msra.mxu0 %v1319
        %2232 = vmatprep.subr.bf16.mxu0 %v1352
        %2233 = vmatpush1.bf16.msra.mxu0 %v1351
        %2234 = vmatprep.subr.bf16.mxu0 %v1384
        %2235 = vmatpush1.bf16.msra.mxu0 %v1383
        %2236 = vmatprep.subr.bf16.mxu0 %v1416
        %2237 = vmatpush1.bf16.msra.mxu0 %v1415
        %2238 = vmatprep.subr.bf16.mxu0 %v1448
        %2239 = vmatpush1.bf16.msra.mxu0 %v1447
        %2240 = vmatprep.subr.bf16.mxu0 %v1480
        %2241 = vmatpush1.bf16.msra.mxu0 %v1479
        %2242 = vmatprep.subr.bf16.mxu0 %v1512
        %2243 = vmatpush1.bf16.msra.mxu0 %v1511
        %2244 = vmatprep.subr.bf16.mxu0 0
        %2245 = vmatpush1.bf16.msra.mxu0 0
        %2246 = vmatprep.subr.bf16.mxu0 0
        %2247 = vmatpush1.bf16.msra.mxu0 0
        %2248 = vmatprep.subr.bf16.mxu0 0
        %2249 = vmatpush1.bf16.msra.mxu0 0
        %2250 = vmatprep.subr.bf16.mxu0 0
        %2251 = vmatpush1.bf16.msra.mxu0 0
        %2252 = vmatprep.subr.bf16.mxu0 0
        %2253 = vmatpush1.bf16.msra.mxu0 0
        %2254 = vmatprep.subr.bf16.mxu0 0
        %2255 = vmatpush1.bf16.msra.mxu0 0
        %2256 = vmatprep.subr.bf16.mxu0 0
        %2257 = vmatpush1.bf16.msra.mxu0 0
        %2258 = vmatprep.subr.bf16.mxu0 0
        %2259 = vmatpush1.bf16.msra.mxu0 0
        %2260 = vmatprep.mubr.bf16.mxu0 0
        %2261 = vmatmul.mubr.bf16.gmra.mrb[0].mxu0 %v240
        %v2262 = vpop.f32.mrb[0].mxu0
        %v2263 = vadd.f32 0.0, %v2262
        %v2264 = vpop.f32.mrb[0].mxu0
        %v2265 = vadd.f32 0.0, %v2264
        %v2266 = vpop.f32.mrb[0].mxu0
        %v2267 = vpop.f32.mrb[0].mxu0
        %2268 = vdwg.mxu0
        %2269 = vmatprep.subr.bf16.mxu0 %v1290
        %2270 = vmatpush1.bf16.msra.mxu0 %v1289
        %2271 = vmatprep.subr.bf16.mxu0 %v1322
        %2272 = vmatpush1.bf16.msra.mxu0 %v1321
        %2273 = vmatprep.subr.bf16.mxu0 %v1354
        %2274 = vmatpush1.bf16.msra.mxu0 %v1353
        %2275 = vmatprep.subr.bf16.mxu0 %v1386
        %2276 = vmatpush1.bf16.msra.mxu0 %v1385
        %2277 = vmatprep.subr.bf16.mxu0 %v1418
        %2278 = vmatpush1.bf16.msra.mxu0 %v1417
        %2279 = vmatprep.subr.bf16.mxu0 %v1450
        %2280 = vmatpush1.bf16.msra.mxu0 %v1449
        %2281 = vmatprep.subr.bf16.mxu0 %v1482
        %2282 = vmatpush1.bf16.msra.mxu0 %v1481
        %2283 = vmatprep.subr.bf16.mxu0 %v1514
        %2284 = vmatpush1.bf16.msra.mxu0 %v1513
        %2285 = vmatprep.subr.bf16.mxu0 0
        %2286 = vmatpush1.bf16.msra.mxu0 0
        %2287 = vmatprep.subr.bf16.mxu0 0
        %2288 = vmatpush1.bf16.msra.mxu0 0
        %2289 = vmatprep.subr.bf16.mxu0 0
        %2290 = vmatpush1.bf16.msra.mxu0 0
        %2291 = vmatprep.subr.bf16.mxu0 0
        %2292 = vmatpush1.bf16.msra.mxu0 0
        %2293 = vmatprep.subr.bf16.mxu0 0
        %2294 = vmatpush1.bf16.msra.mxu0 0
        %2295 = vmatprep.subr.bf16.mxu0 0
        %2296 = vmatpush1.bf16.msra.mxu0 0
        %2297 = vmatprep.subr.bf16.mxu0 0
        %2298 = vmatpush1.bf16.msra.mxu0 0
        %2299 = vmatprep.subr.bf16.mxu0 0
        %2300 = vmatpush1.bf16.msra.mxu0 0
        %2301 = vmatprep.mubr.bf16.mxu0 0
        %2302 = vmatmul.mubr.bf16.gmra.mrb[0].mxu0 %v240
        %v2303 = vpop.f32.mrb[0].mxu0
        %v2304 = vadd.f32 0.0, %v2303
        %v2305 = vpop.f32.mrb[0].mxu0
        %v2306 = vadd.f32 0.0, %v2305
        %v2307 = vpop.f32.mrb[0].mxu0
        %v2308 = vpop.f32.mrb[0].mxu0
        %2309 = vdwg.mxu0
        %2310 = vmatprep.subr.bf16.mxu0 %v1292
        %2311 = vmatpush1.bf16.msra.mxu0 %v1291
        %2312 = vmatprep.subr.bf16.mxu0 %v1324
        %2313 = vmatpush1.bf16.msra.mxu0 %v1323
        %2314 = vmatprep.subr.bf16.mxu0 %v1356
        %2315 = vmatpush1.bf16.msra.mxu0 %v1355
        %2316 = vmatprep.subr.bf16.mxu0 %v1388
        %2317 = vmatpush1.bf16.msra.mxu0 %v1387
        %2318 = vmatprep.subr.bf16.mxu0 %v1420
        %2319 = vmatpush1.bf16.msra.mxu0 %v1419
        %2320 = vmatprep.subr.bf16.mxu0 %v1452
        %2321 = vmatpush1.bf16.msra.mxu0 %v1451
        %2322 = vmatprep.subr.bf16.mxu0 %v1484
        %2323 = vmatpush1.bf16.msra.mxu0 %v1483
        %2324 = vmatprep.subr.bf16.mxu0 %v1516
        %2325 = vmatpush1.bf16.msra.mxu0 %v1515
        %2326 = vmatprep.subr.bf16.mxu0 0
        %2327 = vmatpush1.bf16.msra.mxu0 0
        %2328 = vmatprep.subr.bf16.mxu0 0
        %2329 = vmatpush1.bf16.msra.mxu0 0
        %2330 = vmatprep.subr.bf16.mxu0 0
        %2331 = vmatpush1.bf16.msra.mxu0 0
        %2332 = vmatprep.subr.bf16.mxu0 0
        %2333 = vmatpush1.bf16.msra.mxu0 0
        %2334 = vmatprep.subr.bf16.mxu0 0
        %2335 = vmatpush1.bf16.msra.mxu0 0
        %2336 = vmatprep.subr.bf16.mxu0 0
        %2337 = vmatpush1.bf16.msra.mxu0 0
        %2338 = vmatprep.subr.bf16.mxu0 0
        %2339 = vmatpush1.bf16.msra.mxu0 0
        %2340 = vmatprep.subr.bf16.mxu0 0
        %2341 = vmatpush1.bf16.msra.mxu0 0
        %2342 = vmatprep.mubr.bf16.mxu0 0
        %2343 = vmatmul.mubr.bf16.gmra.mrb[0].mxu0 %v240
        %v2344 = vpop.f32.mrb[0].mxu0
        %v2345 = vadd.f32 0.0, %v2344
        %v2346 = vpop.f32.mrb[0].mxu0
        %v2347 = vadd.f32 0.0, %v2346
        %v2348 = vpop.f32.mrb[0].mxu0
        %v2349 = vpop.f32.mrb[0].mxu0
        %2350 = vdwg.mxu0
        %2351 = vmatprep.subr.bf16.mxu0 %v1294
        %2352 = vmatpush1.bf16.msra.mxu0 %v1293
        %2353 = vmatprep.subr.bf16.mxu0 %v1326
        %2354 = vmatpush1.bf16.msra.mxu0 %v1325
        %2355 = vmatprep.subr.bf16.mxu0 %v1358
        %2356 = vmatpush1.bf16.msra.mxu0 %v1357
        %2357 = vmatprep.subr.bf16.mxu0 %v1390
        %2358 = vmatpush1.bf16.msra.mxu0 %v1389
        %2359 = vmatprep.subr.bf16.mxu0 %v1422
        %2360 = vmatpush1.bf16.msra.mxu0 %v1421
        %2361 = vmatprep.subr.bf16.mxu0 %v1454
        %2362 = vmatpush1.bf16.msra.mxu0 %v1453
        %2363 = vmatprep.subr.bf16.mxu0 %v1486
        %2364 = vmatpush1.bf16.msra.mxu0 %v1485
        %2365 = vmatprep.subr.bf16.mxu0 %v1518
        %2366 = vmatpush1.bf16.msra.mxu0 %v1517
        %2367 = vmatprep.subr.bf16.mxu0 0
        %2368 = vmatpush1.bf16.msra.mxu0 0
        %2369 = vmatprep.subr.bf16.mxu0 0
        %2370 = vmatpush1.bf16.msra.mxu0 0
        %2371 = vmatprep.subr.bf16.mxu0 0
        %2372 = vmatpush1.bf16.msra.mxu0 0
        %2373 = vmatprep.subr.bf16.mxu0 0
        %2374 = vmatpush1.bf16.msra.mxu0 0
        %2375 = vmatprep.subr.bf16.mxu0 0
        %2376 = vmatpush1.bf16.msra.mxu0 0
        %2377 = vmatprep.subr.bf16.mxu0 0
        %2378 = vmatpush1.bf16.msra.mxu0 0
        %2379 = vmatprep.subr.bf16.mxu0 0
        %2380 = vmatpush1.bf16.msra.mxu0 0
        %2381 = vmatprep.subr.bf16.mxu0 0
        %2382 = vmatpush1.bf16.msra.mxu0 0
        %2383 = vmatprep.mubr.bf16.mxu0 0
        %2384 = vmatmul.mubr.bf16.gmra.mrb[0].mxu0 %v240
        %v2385 = vpop.f32.mrb[0].mxu0
        %v2386 = vadd.f32 0.0, %v2385
        %v2387 = vpop.f32.mrb[0].mxu0
        %v2388 = vadd.f32 0.0, %v2387
        %v2389 = vpop.f32.mrb[0].mxu0
        %v2390 = vpop.f32.mrb[0].mxu0
        %2391 = vdwg.mxu0
        %2392 = vmatprep.subr.bf16.mxu0 %v1296
        %2393 = vmatpush1.bf16.msra.mxu0 %v1295
        %2394 = vmatprep.subr.bf16.mxu0 %v1328
        %2395 = vmatpush1.bf16.msra.mxu0 %v1327
        %2396 = vmatprep.subr.bf16.mxu0 %v1360
        %2397 = vmatpush1.bf16.msra.mxu0 %v1359
        %2398 = vmatprep.subr.bf16.mxu0 %v1392
        %2399 = vmatpush1.bf16.msra.mxu0 %v1391
        %2400 = vmatprep.subr.bf16.mxu0 %v1424
        %2401 = vmatpush1.bf16.msra.mxu0 %v1423
        %2402 = vmatprep.subr.bf16.mxu0 %v1456
        %2403 = vmatpush1.bf16.msra.mxu0 %v1455
        %2404 = vmatprep.subr.bf16.mxu0 %v1488
        %2405 = vmatpush1.bf16.msra.mxu0 %v1487
        %2406 = vmatprep.subr.bf16.mxu0 %v1520
        %2407 = vmatpush1.bf16.msra.mxu0 %v1519
        %2408 = vmatprep.subr.bf16.mxu0 0
        %2409 = vmatpush1.bf16.msra.mxu0 0
        %2410 = vmatprep.subr.bf16.mxu0 0
        %2411 = vmatpush1.bf16.msra.mxu0 0
        %2412 = vmatprep.subr.bf16.mxu0 0
        %2413 = vmatpush1.bf16.msra.mxu0 0
        %2414 = vmatprep.subr.bf16.mxu0 0
        %2415 = vmatpush1.bf16.msra.mxu0 0
        %2416 = vmatprep.subr.bf16.mxu0 0
        %2417 = vmatpush1.bf16.msra.mxu0 0
        %2418 = vmatprep.subr.bf16.mxu0 0
        %2419 = vmatpush1.bf16.msra.mxu0 0
        %2420 = vmatprep.subr.bf16.mxu0 0
        %2421 = vmatpush1.bf16.msra.mxu0 0
        %2422 = vmatprep.subr.bf16.mxu0 0
        %2423 = vmatpush1.bf16.msra.mxu0 0
        %2424 = vmatprep.mubr.bf16.mxu0 0
        %2425 = vmatmul.mubr.bf16.gmra.mrb[0].mxu0 %v240
        %v2426 = vpop.f32.mrb[0].mxu0
        %v2427 = vadd.f32 0.0, %v2426
        %v2428 = vpop.f32.mrb[0].mxu0
        %v2429 = vadd.f32 0.0, %v2428
        %v2430 = vpop.f32.mrb[0].mxu0
        %v2431 = vpop.f32.mrb[0].mxu0
        %2432 = vdwg.mxu0
        %v2433 = vpack.c.bf16 %v1812, %v1812
        %v2434 = vpack.c.bf16 %v1814, %v1814
        %v2435 = vpack.c.bf16 %v1853, %v1853
        %v2436 = vpack.c.bf16 %v1855, %v1855
        %v2437 = vpack.c.bf16 %v1894, %v1894
        %v2438 = vpack.c.bf16 %v1896, %v1896
        %v2439 = vpack.c.bf16 %v1935, %v1935
        %v2440 = vpack.c.bf16 %v1937, %v1937
        %v2441 = vpack.c.bf16 %v1976, %v1976
        %v2442 = vpack.c.bf16 %v1978, %v1978
        %v2443 = vpack.c.bf16 %v2017, %v2017
        %v2444 = vpack.c.bf16 %v2019, %v2019
        %v2445 = vpack.c.bf16 %v2058, %v2058
        %v2446 = vpack.c.bf16 %v2060, %v2060
        %v2447 = vpack.c.bf16 %v2099, %v2099
        %v2448 = vpack.c.bf16 %v2101, %v2101
        %v2449 = vpack.c.bf16 %v2140, %v2140
        %v2450 = vpack.c.bf16 %v2142, %v2142
        %v2451 = vpack.c.bf16 %v2181, %v2181
        %v2452 = vpack.c.bf16 %v2183, %v2183
        %v2453 = vpack.c.bf16 %v2222, %v2222
        %v2454 = vpack.c.bf16 %v2224, %v2224
        %v2455 = vpack.c.bf16 %v2263, %v2263
        %v2456 = vpack.c.bf16 %v2265, %v2265
        %v2457 = vpack.c.bf16 %v2304, %v2304
        %v2458 = vpack.c.bf16 %v2306, %v2306
        %v2459 = vpack.c.bf16 %v2345, %v2345
        %v2460 = vpack.c.bf16 %v2347, %v2347
        %v2461 = vpack.c.bf16 %v2386, %v2386
        %v2462 = vpack.c.bf16 %v2388, %v2388
        %v2463 = vpack.c.bf16 %v2427, %v2427
        %v2464 = vpack.c.bf16 %v2429, %v2429
        %v2497 = vunpack.c.l.b16 %v2433
        %v2498 = vunpack.c.l.b16 %v2434
        %v2499 = vunpack.c.l.b16 %v2435
        %v2500 = vunpack.c.l.b16 %v2436
        %v2501 = vunpack.c.l.b16 %v2437
        %v2502 = vunpack.c.l.b16 %v2438
        %v2503 = vunpack.c.l.b16 %v2439
        %v2504 = vunpack.c.l.b16 %v2440
        %v2505 = vunpack.c.l.b16 %v2441
        %v2506 = vunpack.c.l.b16 %v2442
        %v2507 = vunpack.c.l.b16 %v2443
        %v2508 = vunpack.c.l.b16 %v2444
        %v2509 = vunpack.c.l.b16 %v2445
        %v2510 = vunpack.c.l.b16 %v2446
        %v2511 = vunpack.c.l.b16 %v2447
        %v2512 = vunpack.c.l.b16 %v2448
        %v2513 = vunpack.c.l.b16 %v2449
        %v2514 = vunpack.c.l.b16 %v2450
        %v2515 = vunpack.c.l.b16 %v2451
        %v2516 = vunpack.c.l.b16 %v2452
        %v2517 = vunpack.c.l.b16 %v2453
        %v2518 = vunpack.c.l.b16 %v2454
        %v2519 = vunpack.c.l.b16 %v2455
        %v2520 = vunpack.c.l.b16 %v2456
        %v2521 = vunpack.c.l.b16 %v2457
        %v2522 = vunpack.c.l.b16 %v2458
        %v2523 = vunpack.c.l.b16 %v2459
        %v2524 = vunpack.c.l.b16 %v2460
        %v2525 = vunpack.c.l.b16 %v2461
        %v2526 = vunpack.c.l.b16 %v2462
        %v2527 = vunpack.c.l.b16 %v2463
        %v2528 = vunpack.c.l.b16 %v2464
        %v2529 = vpack.c.b16 %v2498, %v2497
        %v2530 = vpack.c.b16 %v2500, %v2499
        %v2531 = vpack.c.b16 %v2502, %v2501
        %v2532 = vpack.c.b16 %v2504, %v2503
        %v2533 = vpack.c.b16 %v2506, %v2505
        %v2534 = vpack.c.b16 %v2508, %v2507
        %v2535 = vpack.c.b16 %v2510, %v2509
        %v2536 = vpack.c.b16 %v2512, %v2511
        %v2537 = vpack.c.b16 %v2514, %v2513
        %v2538 = vpack.c.b16 %v2516, %v2515
        %v2539 = vpack.c.b16 %v2518, %v2517
        %v2540 = vpack.c.b16 %v2520, %v2519
        %v2541 = vpack.c.b16 %v2522, %v2521
        %v2542 = vpack.c.b16 %v2524, %v2523
        %v2543 = vpack.c.b16 %v2526, %v2525
        %v2544 = vpack.c.b16 %v2528, %v2527
        %2561 = vst [vmem:[%s223] sm:$0xff] %v2529
        %2562 = vst [vmem:[%s223 + $0x8] sm:$0xff] %v2530
        %2563 = vst [vmem:[%s223 + $0x10] sm:$0xff] %v2531
        %2564 = vst [vmem:[%s223 + $0x18] sm:$0xff] %v2532
        %2565 = vst [vmem:[%s223 + $0x20] sm:$0xff] %v2533
        %2566 = vst [vmem:[%s223 + $0x28] sm:$0xff] %v2534
        %2567 = vst [vmem:[%s223 + $0x30] sm:$0xff] %v2535
        %2568 = vst [vmem:[%s223 + $0x38] sm:$0xff] %v2536
        %2569 = vst [vmem:[%s223 + $0x40] sm:$0xff] %v2537
        %2570 = vst [vmem:[%s223 + $0x48] sm:$0xff] %v2538
        %2571 = vst [vmem:[%s223 + $0x50] sm:$0xff] %v2539
        %2572 = vst [vmem:[%s223 + $0x58] sm:$0xff] %v2540
        %2573 = vst [vmem:[%s223 + $0x60] sm:$0xff] %v2541
        %2574 = vst [vmem:[%s223 + $0x68] sm:$0xff] %v2542
        %2575 = vst [vmem:[%s223 + $0x70] sm:$0xff] %v2543
        %2576 = vst [vmem:[%s223 + $0x78] sm:$0xff] %v2544
        %v2577 = vadd.f32 %v1812, %v1814
        %v2578 = vadd.f32 %v2577, %v1853
        %v2579 = vadd.f32 %v2578, %v1855
        %v2580 = vadd.f32 %v2579, %v1894
        %v2581 = vadd.f32 %v2580, %v1896
        %v2582 = vadd.f32 %v2581, %v1935
        %v2583 = vadd.f32 %v2582, %v1937
        %v2584 = vadd.f32 %v2583, %v1976
        %v2585 = vadd.f32 %v2584, %v1978
        %v2586 = vadd.f32 %v2585, %v2017
        %v2587 = vadd.f32 %v2586, %v2019
        %v2588 = vadd.f32 %v2587, %v2058
        %v2589 = vadd.f32 %v2588, %v2060
        %v2590 = vadd.f32 %v2589, %v2099
        %v2591 = vadd.f32 %v2590, %v2101
        %v2592 = vadd.f32 %v2591, %v2140
        %v2593 = vadd.f32 %v2592, %v2142
        %v2594 = vadd.f32 %v2593, %v2181
        %v2595 = vadd.f32 %v2594, %v2183
        %v2596 = vadd.f32 %v2595, %v2222
        %v2597 = vadd.f32 %v2596, %v2224
        %v2598 = vadd.f32 %v2597, %v2263
        %v2599 = vadd.f32 %v2598, %v2265
        %v2600 = vadd.f32 %v2599, %v2304
        %v2601 = vadd.f32 %v2600, %v2306
        %v2602 = vadd.f32 %v2601, %v2345
        %v2603 = vadd.f32 %v2602, %v2347
        %v2604 = vadd.f32 %v2603, %v2386
        %v2605 = vadd.f32 %v2604, %v2388
        %v2606 = vadd.f32 %v2605, %v2427
        %v2607 = vadd.f32 %v2606, %v2429
        %2608 = vadd.xlane.f32.xlu0 %v2607
        %v2609 = vpop.xlane.xlu0 %2608
        %v2610 = vmul.f32 %v1812, %v1812
        %v2611 = vmul.f32 %v1814, %v1814
        %v2612 = vmul.f32 %v1853, %v1853
        %v2613 = vmul.f32 %v1855, %v1855
        %v2614 = vmul.f32 %v1894, %v1894
        %v2615 = vmul.f32 %v1896, %v1896
        %v2616 = vmul.f32 %v1935, %v1935
        %v2617 = vmul.f32 %v1937, %v1937
        %v2618 = vmul.f32 %v1976, %v1976
        %v2619 = vmul.f32 %v1978, %v1978
        %v2620 = vmul.f32 %v2017, %v2017
        %v2621 = vmul.f32 %v2019, %v2019
        %v2622 = vmul.f32 %v2058, %v2058
        %v2623 = vmul.f32 %v2060, %v2060
        %v2624 = vmul.f32 %v2099, %v2099
        %v2625 = vmul.f32 %v2101, %v2101
        %v2626 = vmul.f32 %v2140, %v2140
        %v2627 = vmul.f32 %v2142, %v2142
        %v2628 = vmul.f32 %v2181, %v2181
        %v2629 = vmul.f32 %v2183, %v2183
        %v2630 = vmul.f32 %v2222, %v2222
        %v2631 = vmul.f32 %v2224, %v2224
        %v2632 = vmul.f32 %v2263, %v2263
        %v2633 = vmul.f32 %v2265, %v2265
        %v2634 = vmul.f32 %v2304, %v2304
        %v2635 = vmul.f32 %v2306, %v2306
        %v2636 = vmul.f32 %v2345, %v2345
        %v2637 = vmul.f32 %v2347, %v2347
        %v2638 = vmul.f32 %v2386, %v2386
        %v2639 = vmul.f32 %v2388, %v2388
        %v2640 = vmul.f32 %v2427, %v2427
        %v2641 = vmul.f32 %v2429, %v2429
        %v2642 = vadd.f32 %v2610, %v2611
        %v2643 = vadd.f32 %v2642, %v2612
        %v2644 = vadd.f32 %v2643, %v2613
        %v2645 = vadd.f32 %v2644, %v2614
        %v2646 = vadd.f32 %v2645, %v2615
        %v2647 = vadd.f32 %v2646, %v2616
        %v2648 = vadd.f32 %v2647, %v2617
        %v2649 = vadd.f32 %v2648, %v2618
        %v2650 = vadd.f32 %v2649, %v2619
        %v2651 = vadd.f32 %v2650, %v2620
        %v2652 = vadd.f32 %v2651, %v2621
        %v2653 = vadd.f32 %v2652, %v2622
        %v2654 = vadd.f32 %v2653, %v2623
        %v2655 = vadd.f32 %v2654, %v2624
        %v2656 = vadd.f32 %v2655, %v2625
        %v2657 = vadd.f32 %v2656, %v2626
        %v2658 = vadd.f32 %v2657, %v2627
        %v2659 = vadd.f32 %v2658, %v2628
        %v2660 = vadd.f32 %v2659, %v2629
        %v2661 = vadd.f32 %v2660, %v2630
        %v2662 = vadd.f32 %v2661, %v2631
        %v2663 = vadd.f32 %v2662, %v2632
        %v2664 = vadd.f32 %v2663, %v2633
        %v2665 = vadd.f32 %v2664, %v2634
        %v2666 = vadd.f32 %v2665, %v2635
        %v2667 = vadd.f32 %v2666, %v2636
        %v2668 = vadd.f32 %v2667, %v2637
        %v2669 = vadd.f32 %v2668, %v2638
        %v2670 = vadd.f32 %v2669, %v2639
        %v2671 = vadd.f32 %v2670, %v2640
        %v2672 = vadd.f32 %v2671, %v2641
        %2673 = vadd.xlane.f32.xlu0 %v2672
        %v2674 = vpop.xlane.xlu0 %2673
        %v2675 = vld [vmem:[%s230] sm:$0xff]
        %v2676 = vadd.f32 %v2675, %v2609
        %2677 = vst [vmem:[%s230] sm:$0xff] %v2676
        %s2678 = scalar_lea.vmem %s230, 8 [#allocation8]
        %v2679 = vld [vmem:[%s2678] sm:$0xff]
        %v2680 = vadd.f32 %v2679, %v2674
        %2681 = vst [vmem:[%s2678] sm:$0xff] %v2680
        %s2682 = sand.u32 %s96, 1
        %s2683 = scalar_lea.sflag [#allocation4], %s2682
        %s2684 = sand.u32 %s96, 1
        %s2685 = smul.addr %s2684, 128
        %s2686 = scalar_lea.vmem [#allocation7], %s2685
        %s2687 = sand.u32 %s122, 1
        %s2688 = scalar_lea.sflag [#allocation9], %s2687
        %s2689 = sand.u32 %s122, 1
        %s2690 = smul.addr %s2689, 16
        %s2691 = scalar_lea.vmem [#allocation8], %s2690
        // Predicated region
        $region41: #{tpu_custom_call.1} parent=27 // pred_check
          %p2692 = pneg %p106
        $region42: #{tpu_custom_call.1} parent=27 // pred_check_branch
          %2694 = sbr.rel (%p2692) target = $region44
        $region43: #{tpu_custom_call.1} parent=27 // pred_region
          %s2695 = smul.u32 32, %s30
          %s2697 = ssub.s32 2048, 2048
          %2698 = vsyncadd %s2683, %s2697
          %s2699 = smul.addr %s29, 32
          %s2700 = sadd.s32 %s2695, %s2699
          %s2701 = smul.addr %s2700, 64
          %s2702 = scalar_lea.hbm %s2, %s2701
          %s2704 = sshll.u32 %s2686, 4
          %s2705 = int_to_ptr.vmem [resolvable:$true] %s2704
          %2707 = dma.vmem_to_hbm [thread:$0]  %s2705, 2048, %s2702, %s2683
        $region44: #{tpu_custom_call.1} parent=27 // pred_fallthru
          _
        // Predicated region
        $region45: #{tpu_custom_call.1} parent=27 // pred_check
          %p2708 = pneg %p132
        $region46: #{tpu_custom_call.1} parent=27 // pred_check_branch
          %2710 = sbr.rel (%p2708) target = $region48
        $region47: #{tpu_custom_call.1} parent=27 // pred_region
          %s2712 = ssub.s32 256, 256
          %2713 = vsyncadd %s2688, %s2712
          %s2714 = smul.addr %s29, 2
          %s2715 = smul.addr %s2714, 128
          %s2716 = scalar_lea.hbm %s3, %s2715
          %s2717 = sshll.u32 %s2691, 4
          %s2718 = int_to_ptr.vmem [resolvable:$true] %s2717
          %2723 = dma.vmem_to_hbm [thread:$0]  %s2718, 256, %s2716, %s2688, 128, 128, 8
        $region48: #{tpu_custom_call.1} parent=27 // pred_fallthru
          _
      $region28: #{tpu_custom_call.1} parent=5 // pred_fallthru
        _
      %p2724 = scmp.le.s32.totalorder 2, %s20
      // Predicated region
      $region49: #{tpu_custom_call.1} parent=5 // pred_check
        %p2725 = pneg %p2724
      $region50: #{tpu_custom_call.1} parent=5 // pred_check_branch
        %2727 = sbr.rel (%p2725) target = $region52
      $region51: #{tpu_custom_call.1} parent=5 // pred_region
        %s2728 = ssub.s32 %s20, 2
        // Predicated region
        $region53: #{tpu_custom_call.1} parent=51 // pred_check
          %p2729 = pneg %p112
        $region54: #{tpu_custom_call.1} parent=51 // pred_check_branch
          %2731 = sbr.rel (%p2729) target = $region56
        $region55: #{tpu_custom_call.1} parent=51 // pred_region
          %s2732 = sand.u32 %s97, 1
          %s2733 = scalar_lea.sflag [#allocation4], %s2732
          %s2734 = sand.u32 %s97, 1
          %s2735 = smul.addr %s2734, 128
          %s2736 = scalar_lea.vmem [#allocation7], %s2735
          %2737 = dma.done %s2733, 2048
        $region56: #{tpu_custom_call.1} parent=51 // pred_fallthru
          _
        // Predicated region
        $region57: #{tpu_custom_call.1} parent=51 // pred_check
          %p2738 = pneg %p138
        $region58: #{tpu_custom_call.1} parent=51 // pred_check_branch
          %2740 = sbr.rel (%p2738) target = $region60
        $region59: #{tpu_custom_call.1} parent=51 // pred_region
          %s2741 = sand.u32 %s123, 1
          %s2742 = scalar_lea.sflag [#allocation9], %s2741
          %s2743 = sand.u32 %s123, 1
          %s2744 = smul.addr %s2743, 16
          %s2745 = scalar_lea.vmem [#allocation8], %s2744
          %2746 = dma.done %s2742, 256
        $region60: #{tpu_custom_call.1} parent=51 // pred_fallthru
          _
      $region52: #{tpu_custom_call.1} parent=5 // pred_fallthru
        _
    $region6: #{tpu_custom_call.1} parent=1 // loop_footer
      %s24 = sadd.s32 1, %s20
    $region7: #{tpu_custom_call.1} parent=1 // loop_footer_branch
      %19 = sbr.rel target = $region3
    $region8: #{tpu_custom_call.1} parent=1 // loop_exit
      _
    %2747 = vsyncpa [#allocation3], 1
    %s2748 = scalar_lea.sflag [#allocation3], 1
    %2749 = vsyncpa %s2748, 1
    %2750 = vsyncpa [#allocation6], 1
    %2751 = vsyncpa [#allocation4], 1
    %s2752 = scalar_lea.sflag [#allocation4], 1
    %2753 = vsyncpa %s2752, 1
    %2754 = vsyncpa [#allocation9], 1
    %s2755 = scalar_lea.sflag [#allocation9], 1
    %2756 = vsyncpa %s2755, 1

</llo_original>
